<compile_context>
chip_gen: v6e
topology: v6e:2x2x1
jax: 0.10.0
libtpu: 0.0.40
codegen_flags: <defaults>
</compile_context>

<pallas_src>
import functools

import jax
import jax.numpy as jnp
from jax import lax
from jax.experimental import pallas as pl
from jax.experimental.pallas import tpu as pltpu


def _round_up(v: int, m: int) -> int:
    return ((v + m - 1) // m) * m


def _pad_cast(a, shape, dtype):
    """Cast then zero-pad to `shape`; no-op pad when shapes already align."""
    a = a.astype(dtype)
    pads = tuple((0, t - s) for s, t in zip(a.shape, shape))
    if any(p[1] for p in pads):
        a = jnp.pad(a, pads)
    return a


def _vmem_limit_bytes() -> int:
    try:
        kind = jax.devices()[0].device_kind.lower()
    except Exception:
        return 64 << 20
    # v7x: 64 MiB physical per TC -> leave headroom; v5e/v6e have 128 MiB physical
    # (scoped defaults are only 16 / 32 MiB, so raise them).
    return (48 << 20) if "v7" in kind else (64 << 20)


# --------------------------------------------------------------------------------------
# Kernel 1: projection  xw = X @ W   (F reduction-tiled, f32 accumulate, bf16 output)
#   grid (B, Np/bm, Fp/bf)
# --------------------------------------------------------------------------------------
def _proj_kernel(x_ref, w_ref, xw_ref, acc_ref):
    f = pl.program_id(2)

    @pl.when(f == 0)
    def _():
        acc_ref[...] = jnp.zeros_like(acc_ref)

    acc_ref[...] += jnp.dot(x_ref[...], w_ref[...], preferred_element_type=jnp.float32)

    @pl.when(f == pl.num_programs(2) - 1)
    def _():
        xw_ref[...] = acc_ref[...].astype(xw_ref.dtype)


# --------------------------------------------------------------------------------------
# Kernel 2: tiled aggregation
#   out[i] = mask_i * ( d_i * sum_k adj[i,k] @ (d_k * xw[k]) + loop*xw[i] + bias )
#   grid (B, Np/bm, Np/bk); f32 accumulation directly in the resident output block.
# --------------------------------------------------------------------------------------
def _agg_kernel(adj_ref, xwk_ref, dk_ref, xwi_ref, di_ref, m_ref, b_ref, out_ref,
                *, loop_weight):
    k = pl.program_id(2)

    @pl.when(k == 0)
    def _():
        out_ref[...] = jnp.zeros_like(out_ref)

    # Column-side normalization folded into the streamed features; bf16 into the MXU.
    yk = (dk_ref[...] * xwk_ref[...].astype(jnp.float32)).astype(xwk_ref.dtype)
    out_ref[...] += jnp.dot(adj_ref[...], yk, preferred_element_type=jnp.float32)

    @pl.when(k == pl.num_programs(2) - 1)
    def _():
        out_ref[...] = m_ref[...] * (
            di_ref[...] * out_ref[...]
            + loop_weight * xwi_ref[...].astype(jnp.float32)
            + b_ref[...]
        )


# --------------------------------------------------------------------------------------
# Wrapper
# --------------------------------------------------------------------------------------
def norm_dense_gcn_conv(x, adj, weight, bias=None, mask=None, *,
                        improved=False, node_block=512, f_block=512):
    orig_dtype = x.dtype
    if x.ndim == 2:
        x = x[None]
    if adj.ndim == 2:
        adj = adj[None]
    B, N, F = x.shape
    Ba = adj.shape[0]                      # adjacency broadcastable in batch (1 or B)
    C = weight.shape[1]

    f32, bf16 = jnp.float32, jnp.bfloat16

    # ---- tile / padding selection (rows and cols share one node tile, no lcm blow-up)
    t = int(node_block)
    Np = _round_up(N, 128)
    if Np <= t:
        t = Np
    else:
        Np = _round_up(N, t)
    bm = bk = t

    Fp = _round_up(F, 128)
    bf_ = int(f_block)
    if Fp <= bf_:
        bf_ = Fp
    else:
        Fp = _round_up(F, bf_)
    Cp = _round_up(C, 128)

    # ---- padded / cast operands ---------------------------------------------------------
    xp = _pad_cast(x, (B, Np, Fp), f32)
    adjp = _pad_cast(adj, (Ba, Np, Np), bf16)          # bf16 stream (exact for 0/1 adj)
    wp = _pad_cast(weight, (Fp, Cp), f32)
    bp = jnp.zeros((1, Cp), f32)
    if bias is not None:
        bp = bp.at[0, :C].set(bias.astype(f32))
    if mask is not None:
        mrow = mask.reshape(-1, N).astype(f32)
        if mrow.shape[0] == 1 and B > 1:
            mrow = jnp.broadcast_to(mrow, (B, N))
    else:
        mrow = jnp.ones((B, N), f32)
    mp = _pad_cast(mrow[..., None], (B, Np, 1), f32)   # padded rows get mask = 0

    # Degrees / rsqrt scales on the ORIGINAL f32 adjacency (cheap XLA reduction, fused
    # with the pad/cast; keeps weighted adjacencies exact despite the bf16 stream).
    deg = jnp.sum(adj.astype(f32), axis=-1)
    dis = lax.rsqrt(jnp.maximum(deg, 1.0))
    dp = _pad_cast(dis[..., None], (Ba, Np, 1), f32)

    loop_w = 2.0 if improved else 1.0
    vmem_limit = _vmem_limit_bytes()
    ab = (lambda b: 0) if Ba == 1 else (lambda b: b)   # shared-adjacency batch map

    # ---- Kernel 1: xw = X @ W  (bf16 output) --------------------------------------------
    proj_cost = pl.CostEstimate(
        flops=2 * B * Np * Fp * Cp,
        transcendentals=0,
        bytes_accessed=4 * B * Np * Fp + 4 * Fp * Cp * (Np // bm) + 2 * B * Np * Cp)

    xw = pl.pallas_call(
        _proj_kernel,
        out_shape=jax.ShapeDtypeStruct((B, Np, Cp), bf16),
        grid=(B, Np // bm, Fp // bf_),
        in_specs=[
            pl.BlockSpec((None, bm, bf_), lambda b, i, f: (b, i, f)),
            pl.BlockSpec((bf_, Cp), lambda b, i, f: (f, 0)),
        ],
        out_specs=pl.BlockSpec((None, bm, Cp), lambda b, i, f: (b, i, 0)),
        scratch_shapes=[pltpu.VMEM((bm, Cp), f32)],
        compiler_params=pltpu.CompilerParams(
            dimension_semantics=("parallel", "parallel", "arbitrary"),
            vmem_limit_bytes=vmem_limit),
        cost_estimate=proj_cost,
    )(xp, wp)

    # ---- Kernel 2: tiled aggregation ----------------------------------------------------
    agg_cost = pl.CostEstimate(
        flops=2 * B * Np * Np * Cp,
        transcendentals=0,
        bytes_accessed=2 * Ba * Np * Np + 2 * B * Np * Cp * (Np // bm) + 4 * B * Np * Cp)

    out = pl.pallas_call(
        functools.partial(_agg_kernel, loop_weight=loop_w),
        out_shape=jax.ShapeDtypeStruct((B, Np, Cp), f32),
        grid=(B, Np // bm, Np // bk),
        in_specs=[
            pl.BlockSpec((None, bm, bk), lambda b, i, k: (ab(b), i, k)),   # adj  (bf16)
            pl.BlockSpec((None, bk, Cp), lambda b, i, k: (b, k, 0)),       # xw_k (bf16)
            pl.BlockSpec((None, bk, 1), lambda b, i, k: (ab(b), k, 0)),    # d_k  (f32)
            pl.BlockSpec((None, bm, Cp), lambda b, i, k: (b, i, 0)),       # xw_i (bf16)
            pl.BlockSpec((None, bm, 1), lambda b, i, k: (ab(b), i, 0)),    # d_i  (f32)
            pl.BlockSpec((None, bm, 1), lambda b, i, k: (b, i, 0)),        # mask_i
            pl.BlockSpec((1, Cp), lambda b, i, k: (0, 0)),                 # bias
        ],
        out_specs=pl.BlockSpec((None, bm, Cp), lambda b, i, k: (b, i, 0)),
        compiler_params=pltpu.CompilerParams(
            dimension_semantics=("parallel", "parallel", "arbitrary"),
            vmem_limit_bytes=vmem_limit),
        cost_estimate=agg_cost,
    )(adjp, xw, dp, xw, dp, mp, bp)

    # Padded rows/cols are garbage-free (mask=0 there) but MUST still be sliced off.
    return out[:, :N, :C].astype(orig_dtype)


# --------------------------------------------------------------------------------------
# Pure-JAX reference (mirrors the PyTorch module).
# --------------------------------------------------------------------------------------
def _reference(x, adj, weight, bias, mask, improved):
    if x.ndim == 2:
        x = x[None]
    if adj.ndim == 2:
        adj = adj[None]
    out = jnp.einsum("bnf,fc->bnc", x, weight)
    deg_inv_sqrt = jnp.maximum(adj.sum(-1), 1.0) ** -0.5
    adj_n = deg_inv_sqrt[..., :, None] * adj * deg_inv_sqrt[..., None, :]
    eye = jnp.eye(adj.shape[-1], dtype=adj.dtype)
    lap = adj_n + (2.0 if improved else 1.0) * eye
    out = jnp.einsum("bij,bjc->bic", lap, out)
    if bias is not None:
        out = out + bias
    if mask is not None:
        out = out * mask.reshape(x.shape[0], x.shape[1], 1).astype(x.dtype)
    return out


if __name__ == "__main__":
    key = jax.random.PRNGKey(0)
    kx, ka, kw, kb = jax.random.split(key, 4)

    B, N, F, C = 2, 16, 32, 8
    x = jax.random.normal(kx, (B, N, F), dtype=jnp.float32)
    # Binary, symmetric adjacency with zero diagonal (typical dense-GCN input; exact in bf16).
    a = (jax.random.uniform(ka, (B, N, N)) < 0.3).astype(jnp.float32)
    adj = jnp.maximum(a, jnp.swapaxes(a, -1, -2)) * (1.0 - jnp.eye(N, dtype=jnp.float32))
    weight = jax.random.normal(kw, (F, C), dtype=jnp.float32) * 0.1
    bias = jax.random.normal(kb, (C,), dtype=jnp.float32) * 0.1
    mask = jnp.broadcast_to((jnp.arange(N) < N - 3).astype(jnp.float32), (B, N))

    gcn = jax.jit(norm_dense_gcn_conv,
                  static_argnames=("improved", "node_block", "f_block"))
    out = jax.block_until_ready(gcn(x, adj, weight, bias=bias, mask=mask, improved=False))

    ref = _reference(x, adj, weight, bias, mask, improved=False)
    err = float(jnp.max(jnp.abs(out - ref)))
    scale = max(1.0, float(jnp.max(jnp.abs(ref))))
    # bf16 feature stream (f32 accumulation) -> allow a loose-but-meaningful tolerance.
    if err > 3e-2 * scale:
        raise AssertionError(f"max abs error vs reference: {err}")
    print("KERNEL_OK")
</pallas_src>

<mosaic_0001>
module attributes {stable_mosaic.version = 11 : i64} {
  func.func @_proj_kernel(%arg0: i32, %arg1: i32, %arg2: i32, %arg3: memref<1x128x128xf32, #tpu.memory_space<vmem>>, %arg4: memref<128x128xf32, #tpu.memory_space<vmem>>, %arg5: memref<1x128x128xbf16, #tpu.memory_space<vmem>>, %arg6: memref<128x128xf32, #tpu.memory_space<vmem>>) attributes {dimension_semantics = [#tpu.dimension_semantics<parallel>, #tpu.dimension_semantics<parallel>, #tpu.dimension_semantics<arbitrary>], iteration_bounds = array<i64: 2, 1, 1>, scalar_prefetch = 0 : i64, scratch_operands = 1 : i64, tpu.core_type = #tpu.core_type<tc>, window_params = [{transform_indices = @transform_0, window_bounds = array<i64: 1, 128, 128>}, {transform_indices = @transform_1, window_bounds = array<i64: 128, 128>}, {transform_indices = @transform_2, window_bounds = array<i64: 1, 128, 128>}]} {
    %c0_i32 = arith.constant 0 : i32
    %0 = arith.cmpi eq, %arg2, %c0_i32 : i32
    %1 = arith.extui %0 : i1 to i32
    %c0_i32_0 = arith.constant 0 : i32
    %2 = arith.cmpi ne, %1, %c0_i32_0 : i32
    scf.if %2 {
      %cst_11 = arith.constant 0.000000e+00 : f32
      %13 = vector.broadcast %cst_11 : f32 to vector<128x128xf32>
      %c0_12 = arith.constant 0 : index
      %c0_13 = arith.constant 0 : index
      %14 = vector.load %arg6[%c0_12, %c0_13] : memref<128x128xf32, #tpu.memory_space<vmem>>, vector<128x128xf32>
      tpu.vector_store %arg6[%c0_12, %c0_13], %13 {strides = array<i32>} : memref<128x128xf32, #tpu.memory_space<vmem>>, vector<128x128xf32>,
    } else {
    }
    %c0 = arith.constant 0 : index
    %c0_1 = arith.constant 0 : index
    %3 = vector.load %arg6[%c0, %c0_1] : memref<128x128xf32, #tpu.memory_space<vmem>>, vector<128x128xf32>
    %c0_2 = arith.constant 0 : index
    %c0_3 = arith.constant 0 : index
    %c0_4 = arith.constant 0 : index
    %4 = vector.load %arg3[%c0_2, %c0_3, %c0_4] : memref<1x128x128xf32, #tpu.memory_space<vmem>>, vector<1x128x128xf32>
    %5 = vector.shape_cast %4 : vector<1x128x128xf32> to vector<128x128xf32>
    %c0_5 = arith.constant 0 : index
    %c0_6 = arith.constant 0 : index
    %6 = vector.load %arg4[%c0_5, %c0_6] : memref<128x128xf32, #tpu.memory_space<vmem>>, vector<128x128xf32>
    %cst = arith.constant dense<0.000000e+00> : vector<128x128xf32>
    %7 = tpu.matmul %5, %6, %cst {dimension_numbers = #tpu.dot_dimension_numbers<[1], [0], [0], [1], [0, 0, 1, 1], [], []>} : vector<128x128xf32>, vector<128x128xf32>, vector<128x128xf32> -> vector<128x128xf32>
    %8 = arith.addf %3, %7 : vector<128x128xf32>
    %c0_7 = arith.constant 0 : index
    %c0_8 = arith.constant 0 : index
    %9 = vector.load %arg6[%c0_7, %c0_8] : memref<128x128xf32, #tpu.memory_space<vmem>>, vector<128x128xf32>
    tpu.vector_store %arg6[%c0_7, %c0_8], %8 {strides = array<i32>} : memref<128x128xf32, #tpu.memory_space<vmem>>, vector<128x128xf32>,
    %c0_i32_9 = arith.constant 0 : i32
    %10 = arith.cmpi eq, %arg2, %c0_i32_9 : i32
    %11 = arith.extui %10 : i1 to i32
    %c0_i32_10 = arith.constant 0 : i32
    %12 = arith.cmpi ne, %11, %c0_i32_10 : i32
    scf.if %12 {
      %c0_11 = arith.constant 0 : index
      %c0_12 = arith.constant 0 : index
      %13 = vector.load %arg6[%c0_11, %c0_12] : memref<128x128xf32, #tpu.memory_space<vmem>>, vector<128x128xf32>
      %14 = arith.truncf %13 : vector<128x128xf32> to vector<128x128xbf16>
      %c0_13 = arith.constant 0 : index
      %c0_14 = arith.constant 0 : index
      %c0_15 = arith.constant 0 : index
      %15 = vector.load %arg5[%c0_13, %c0_14, %c0_15] : memref<1x128x128xbf16, #tpu.memory_space<vmem>>, vector<1x128x128xbf16>
      %16 = vector.shape_cast %15 : vector<1x128x128xbf16> to vector<128x128xbf16>
      %17 = vector.shape_cast %14 : vector<128x128xbf16> to vector<1x128x128xbf16>
      tpu.vector_store %arg5[%c0_13, %c0_14, %c0_15], %17 {strides = array<i32>} : memref<1x128x128xbf16, #tpu.memory_space<vmem>>, vector<1x128x128xbf16>,
    } else {
    }
    return
  }
  func.func @transform_0(%arg0: i32, %arg1: i32, %arg2: i32) -> (i32, i32, i32) {
    %c0_i32 = arith.constant 0 : i32
    return %arg0, %arg1, %arg2 : i32, i32, i32
  }
  func.func @transform_1(%arg0: i32, %arg1: i32, %arg2: i32) -> (i32, i32) {
    %c0_i32 = arith.constant 0 : i32
    %c0_i32_0 = arith.constant 0 : i32
    return %arg2, %c0_i32 : i32, i32
  }
  func.func @transform_2(%arg0: i32, %arg1: i32, %arg2: i32) -> (i32, i32, i32) {
    %c0_i32 = arith.constant 0 : i32
    %c0_i32_0 = arith.constant 0 : i32
    return %arg0, %arg1, %c0_i32 : i32, i32, i32
  }
}

module attributes {stable_mosaic.version = 11 : i64} {
  func.func @_agg_kernel(%arg0: i32, %arg1: i32, %arg2: i32, %arg3: memref<1x128x128xbf16, #tpu.memory_space<vmem>>, %arg4: memref<1x128x128xbf16, #tpu.memory_space<vmem>>, %arg5: memref<1x128x1xf32, #tpu.memory_space<vmem>>, %arg6: memref<1x128x128xbf16, #tpu.memory_space<vmem>>, %arg7: memref<1x128x1xf32, #tpu.memory_space<vmem>>, %arg8: memref<1x128x1xf32, #tpu.memory_space<vmem>>, %arg9: memref<1x128xf32, #tpu.memory_space<vmem>>, %arg10: memref<1x128x128xf32, #tpu.memory_space<vmem>>) attributes {dimension_semantics = [#tpu.dimension_semantics<parallel>, #tpu.dimension_semantics<parallel>, #tpu.dimension_semantics<arbitrary>], iteration_bounds = array<i64: 2, 1, 1>, scalar_prefetch = 0 : i64, scratch_operands = 0 : i64, tpu.core_type = #tpu.core_type<tc>, window_params = [{transform_indices = @transform_0, window_bounds = array<i64: 1, 128, 128>}, {transform_indices = @transform_1, window_bounds = array<i64: 1, 128, 128>}, {transform_indices = @transform_2, window_bounds = array<i64: 1, 128, 1>}, {transform_indices = @transform_3, window_bounds = array<i64: 1, 128, 128>}, {transform_indices = @transform_4, window_bounds = array<i64: 1, 128, 1>}, {transform_indices = @transform_5, window_bounds = array<i64: 1, 128, 1>}, {pipeline_mode = #tpu.pipeline_mode<synchronous>, transform_indices = @transform_6, window_bounds = array<i64: 1, 128>}, {transform_indices = @transform_7, window_bounds = array<i64: 1, 128, 128>}]} {
    %c0_i32 = arith.constant 0 : i32
    %0 = arith.cmpi eq, %arg2, %c0_i32 : i32
    %1 = arith.extui %0 : i1 to i32
    %c0_i32_0 = arith.constant 0 : i32
    %2 = arith.cmpi ne, %1, %c0_i32_0 : i32
    scf.if %2 {
      %cst_17 = arith.constant 0.000000e+00 : f32
      %23 = vector.broadcast %cst_17 : f32 to vector<128x128xf32>
      %c0_18 = arith.constant 0 : index
      %c0_19 = arith.constant 0 : index
      %c0_20 = arith.constant 0 : index
      %24 = vector.load %arg10[%c0_18, %c0_19, %c0_20] : memref<1x128x128xf32, #tpu.memory_space<vmem>>, vector<1x128x128xf32>
      %25 = vector.shape_cast %24 : vector<1x128x128xf32> to vector<128x128xf32>
      %26 = vector.shape_cast %23 : vector<128x128xf32> to vector<1x128x128xf32>
      tpu.vector_store %arg10[%c0_18, %c0_19, %c0_20], %26 {strides = array<i32>} : memref<1x128x128xf32, #tpu.memory_space<vmem>>, vector<1x128x128xf32>,
    } else {
    }
    %c0 = arith.constant 0 : index
    %c0_1 = arith.constant 0 : index
    %c0_2 = arith.constant 0 : index
    %3 = vector.load %arg5[%c0, %c0_1, %c0_2] : memref<1x128x1xf32, #tpu.memory_space<vmem>>, vector<1x128x1xf32>
    %4 = vector.shape_cast %3 : vector<1x128x1xf32> to vector<128x1xf32>
    %c0_3 = arith.constant 0 : index
    %c0_4 = arith.constant 0 : index
    %c0_5 = arith.constant 0 : index
    %5 = vector.load %arg4[%c0_3, %c0_4, %c0_5] : memref<1x128x128xbf16, #tpu.memory_space<vmem>>, vector<1x128x128xbf16>
    %6 = vector.shape_cast %5 : vector<1x128x128xbf16> to vector<128x128xbf16>
    %7 = arith.extf %6 : vector<128x128xbf16> to vector<128x128xf32>
    %8 = vector.broadcast %4 : vector<128x1xf32> to vector<128x128xf32>
    %9 = arith.mulf %8, %7 : vector<128x128xf32>
    %10 = arith.truncf %9 : vector<128x128xf32> to vector<128x128xbf16>
    %c0_6 = arith.constant 0 : index
    %c0_7 = arith.constant 0 : index
    %c0_8 = arith.constant 0 : index
    %11 = vector.load %arg10[%c0_6, %c0_7, %c0_8] : memref<1x128x128xf32, #tpu.memory_space<vmem>>, vector<1x128x128xf32>
    %12 = vector.shape_cast %11 : vector<1x128x128xf32> to vector<128x128xf32>
    %c0_9 = arith.constant 0 : index
    %c0_10 = arith.constant 0 : index
    %c0_11 = arith.constant 0 : index
    %13 = vector.load %arg3[%c0_9, %c0_10, %c0_11] : memref<1x128x128xbf16, #tpu.memory_space<vmem>>, vector<1x128x128xbf16>
    %14 = vector.shape_cast %13 : vector<1x128x128xbf16> to vector<128x128xbf16>
    %cst = arith.constant dense<0.000000e+00> : vector<128x128xf32>
    %15 = tpu.matmul %14, %10, %cst {dimension_numbers = #tpu.dot_dimension_numbers<[1], [0], [0], [1], [0, 0, 1, 1], [], []>} : vector<128x128xbf16>, vector<128x128xbf16>, vector<128x128xf32> -> vector<128x128xf32>
    %16 = arith.addf %12, %15 : vector<128x128xf32>
    %c0_12 = arith.constant 0 : index
    %c0_13 = arith.constant 0 : index
    %c0_14 = arith.constant 0 : index
    %17 = vector.load %arg10[%c0_12, %c0_13, %c0_14] : memref<1x128x128xf32, #tpu.memory_space<vmem>>, vector<1x128x128xf32>
    %18 = vector.shape_cast %17 : vector<1x128x128xf32> to vector<128x128xf32>
    %19 = vector.shape_cast %16 : vector<128x128xf32> to vector<1x128x128xf32>
    tpu.vector_store %arg10[%c0_12, %c0_13, %c0_14], %19 {strides = array<i32>} : memref<1x128x128xf32, #tpu.memory_space<vmem>>, vector<1x128x128xf32>,
    %c0_i32_15 = arith.constant 0 : i32
    %20 = arith.cmpi eq, %arg2, %c0_i32_15 : i32
    %21 = arith.extui %20 : i1 to i32
    %c0_i32_16 = arith.constant 0 : i32
    %22 = arith.cmpi ne, %21, %c0_i32_16 : i32
    scf.if %22 {
      %c0_17 = arith.constant 0 : index
      %c0_18 = arith.constant 0 : index
      %c0_19 = arith.constant 0 : index
      %23 = vector.load %arg8[%c0_17, %c0_18, %c0_19] : memref<1x128x1xf32, #tpu.memory_space<vmem>>, vector<1x128x1xf32>
      %24 = vector.shape_cast %23 : vector<1x128x1xf32> to vector<128x1xf32>
      %c0_20 = arith.constant 0 : index
      %c0_21 = arith.constant 0 : index
      %c0_22 = arith.constant 0 : index
      %25 = vector.load %arg7[%c0_20, %c0_21, %c0_22] : memref<1x128x1xf32, #tpu.memory_space<vmem>>, vector<1x128x1xf32>
      %26 = vector.shape_cast %25 : vector<1x128x1xf32> to vector<128x1xf32>
      %c0_23 = arith.constant 0 : index
      %c0_24 = arith.constant 0 : index
      %c0_25 = arith.constant 0 : index
      %27 = vector.load %arg10[%c0_23, %c0_24, %c0_25] : memref<1x128x128xf32, #tpu.memory_space<vmem>>, vector<1x128x128xf32>
      %28 = vector.shape_cast %27 : vector<1x128x128xf32> to vector<128x128xf32>
      %29 = vector.broadcast %26 : vector<128x1xf32> to vector<128x128xf32>
      %30 = arith.mulf %29, %28 : vector<128x128xf32>
      %c0_26 = arith.constant 0 : index
      %c0_27 = arith.constant 0 : index
      %c0_28 = arith.constant 0 : index
      %31 = vector.load %arg6[%c0_26, %c0_27, %c0_28] : memref<1x128x128xbf16, #tpu.memory_space<vmem>>, vector<1x128x128xbf16>
      %32 = vector.shape_cast %31 : vector<1x128x128xbf16> to vector<128x128xbf16>
      %33 = arith.extf %32 : vector<128x128xbf16> to vector<128x128xf32>
      %cst_29 = arith.constant 1.000000e+00 : f32
      %34 = vector.broadcast %cst_29 : f32 to vector<128x128xf32>
      %35 = arith.mulf %34, %33 : vector<128x128xf32>
      %36 = arith.addf %30, %35 : vector<128x128xf32>
      %c0_30 = arith.constant 0 : index
      %c0_31 = arith.constant 0 : index
      %37 = vector.load %arg9[%c0_30, %c0_31] : memref<1x128xf32, #tpu.memory_space<vmem>>, vector<1x128xf32>
      %38 = vector.broadcast %37 : vector<1x128xf32> to vector<128x128xf32>
      %39 = arith.addf %36, %38 : vector<128x128xf32>
      %40 = vector.broadcast %24 : vector<128x1xf32> to vector<128x128xf32>
      %41 = arith.mulf %40, %39 : vector<128x128xf32>
      %c0_32 = arith.constant 0 : index
      %c0_33 = arith.constant 0 : index
      %c0_34 = arith.constant 0 : index
      %42 = vector.load %arg10[%c0_32, %c0_33, %c0_34] : memref<1x128x128xf32, #tpu.memory_space<vmem>>, vector<1x128x128xf32>
      %43 = vector.shape_cast %42 : vector<1x128x128xf32> to vector<128x128xf32>
      %44 = vector.shape_cast %41 : vector<128x128xf32> to vector<1x128x128xf32>
      tpu.vector_store %arg10[%c0_32, %c0_33, %c0_34], %44 {strides = array<i32>} : memref<1x128x128xf32, #tpu.memory_space<vmem>>, vector<1x128x128xf32>,
    } else {
    }
    return
  }
  func.func @transform_0(%arg0: i32, %arg1: i32, %arg2: i32) -> (i32, i32, i32) {
    %c0_i32 = arith.constant 0 : i32
    return %arg0, %arg1, %arg2 : i32, i32, i32
  }
  func.func @transform_1(%arg0: i32, %arg1: i32, %arg2: i32) -> (i32, i32, i32) {
    %c0_i32 = arith.constant 0 : i32
    %c0_i32_0 = arith.constant 0 : i32
    return %arg0, %arg2, %c0_i32 : i32, i32, i32
  }
  func.func @transform_2(%arg0: i32, %arg1: i32, %arg2: i32) -> (i32, i32, i32) {
    %c0_i32 = arith.constant 0 : i32
    %c0_i32_0 = arith.constant 0 : i32
    return %arg0, %arg2, %c0_i32 : i32, i32, i32
  }
  func.func @transform_3(%arg0: i32, %arg1: i32, %arg2: i32) -> (i32, i32, i32) {
    %c0_i32 = arith.constant 0 : i32
    %c0_i32_0 = arith.constant 0 : i32
    return %arg0, %arg1, %c0_i32 : i32, i32, i32
  }
  func.func @transform_4(%arg0: i32, %arg1: i32, %arg2: i32) -> (i32, i32, i32) {
    %c0_i32 = arith.constant 0 : i32
    %c0_i32_0 = arith.constant 0 : i32
    return %arg0, %arg1, %c0_i32 : i32, i32, i32
  }
  func.func @transform_5(%arg0: i32, %arg1: i32, %arg2: i32) -> (i32, i32, i32) {
    %c0_i32 = arith.constant 0 : i32
    %c0_i32_0 = arith.constant 0 : i32
    return %arg0, %arg1, %c0_i32 : i32, i32, i32
  }
  func.func @transform_6(%arg0: i32, %arg1: i32, %arg2: i32) -> (i32, i32) {
    %c0_i32 = arith.constant 0 : i32
    %c0_i32_0 = arith.constant 0 : i32
    %c0_i32_1 = arith.constant 0 : i32
    return %c0_i32, %c0_i32_0 : i32, i32
  }
  func.func @transform_7(%arg0: i32, %arg1: i32, %arg2: i32) -> (i32, i32, i32) {
    %c0_i32 = arith.constant 0 : i32
    %c0_i32_0 = arith.constant 0 : i32
    return %arg0, %arg1, %c0_i32 : i32, i32, i32
  }
}

</mosaic_0001>

<llo_original>
// kernel: norm_dense_gcn_conv.2
$region0: #{norm_dense_gcn_conv.2}
  #allocation0 [shape = 'u32[]', space=smem, size = 0x4, offset = 0x4, fixed_abs, tag = 'smem constant byte address 0x4 - core index']
  #allocation1 [shape = 'u32[144,128]{1,0:T(1,128)}', space=vmem, size = 0x12000, scoped, tag = 'internal scratch']
  #allocation2 [shape = 'f32[128,128]{1,0:T(8,128)}', space=vmem, size = 0x10000, scoped, tag = 'scratch operand']
  %s0 = inlined_call_operand.vmem [shape: f32[2,128,128], index: 0, kind: input, shape index: {}]
  %s1 = inlined_call_operand.vmem [shape: f32[128,128], index: 1, kind: input, shape index: {}]
  %s2 = inlined_call_operand.vmem [shape: bf16[2,128,128], index: 2, kind: output, shape index: {}]
  %s3 = sld [smem:[#allocation0]]
  $region49: #{norm_dense_gcn_conv.2} parent=0
    _
  %s5 = ssub.s32 1, %s3
  %s6 = scalar_select 0, %s5, %s3
  loop: start=0, step=1, limit=4
  $region2: #{norm_dense_gcn_conv.2} parent=0 // loop_pre_header
    _
  $region3: #{norm_dense_gcn_conv.2} parent=0 // loop_header
    %s8 = sphi 0, %s12
    %p9 = scmp.ge.s32.totalorder %s8, 4
    %s15 = sphi 0, %s34
    %s16 = sphi 0, %s30
    %s17 = sphi 0, %s26
    %s18 = sphi 0, %s15
    %s19 = sphi 0, %s16
    %s20 = sphi 0, %s17
    %s21 = sphi 0, %s18
    %s22 = sphi 0, %s19
    %s23 = sphi 0, %s20
    %s41 = sphi 0, %s43
    %s44 = sphi 0, %s41
    %s45 = sphi 0, %s44
    %s61 = sphi 0, %s45
    %s67 = sphi 0, %s69
    %s70 = sphi 0, %s67
    %s71 = sphi 0, %s70
    %s87 = sphi 0, %s71
    %s95 = sphi 0, %s97
    %s98 = sphi 0, %s95
    %s99 = sphi 0, %s98
    %s115 = sphi 0, %s99
  $region4: #{norm_dense_gcn_conv.2} parent=0 // loop_header_branch
    %11 = sbr.rel (%p9) target = $region8
  $region5: #{norm_dense_gcn_conv.2} parent=0 // loop_body
    %s13 = ssub.s32 %s8, 1
    %s14 = ssub.s32 %s8, 2
    %s24 = sadd.s32 1, %s17
    %p25 = scmp.ge.s32.totalorder %s24, 1
    %s26 = scalar_select %p25, 0, %s24
    %s27 = sadd.s32 1, %s16
    %s28 = scalar_select %p25, %s27, %s16
    %p29 = scmp.ge.s32.totalorder %s28, 1
    %s30 = scalar_select %p29, 0, %s28
    %s31 = sadd.s32 1, %s15
    %s32 = scalar_select %p29, %s31, %s15
    %p33 = scmp.ge.s32.totalorder %s32, 2
    %s34 = scalar_select %p33, 0, %s32
    %s35 = ssub.s32 %s15, %s34
    %s36 = ssub.s32 %s16, %s30
    %s37 = sor.u32 %s35, %s36
    %s38 = ssub.s32 %s17, %s26
    %s39 = sor.u32 %s37, %s38
    %p40 = scmp.eq.s32.totalorder %s39, 0
    %s42 = sadd.s32 %s41, 1
    %s43 = scalar_select %p40, %s41, %s42
    %p46 = pneg %p40
    %p47 = scmp.eq.s32.totalorder %s8, 1
    %p48 = por %p46, %p47
    %p49 = scmp.ne.s32.totalorder %s41, %s44
    %p50 = scmp.eq.s32.totalorder %s8, 0
    %p51 = por %p49, %p50
    %p52 = scmp.ne.s32.totalorder %s41, %s44
    %p53 = scmp.eq.s32.totalorder %s13, 1
    %p54 = por %p52, %p53
    %p55 = scmp.ne.s32.totalorder %s44, %s45
    %p56 = scmp.eq.s32.totalorder %s13, 0
    %p57 = por %p55, %p56
    %p58 = scmp.ne.s32.totalorder %s44, %s45
    %p59 = scmp.eq.s32.totalorder %s14, 1
    %p60 = por %p58, %p59
    %p62 = scmp.ne.s32.totalorder %s45, %s61
    %p63 = scmp.eq.s32.totalorder %s14, 0
    %p64 = por %p62, %p63
    %s65 = ssub.s32 %s17, %s26
    %p66 = scmp.eq.s32.totalorder %s65, 0
    %s68 = sadd.s32 %s67, 1
    %s69 = scalar_select %p66, %s67, %s68
    %p72 = pneg %p66
    %p73 = scmp.eq.s32.totalorder %s8, 1
    %p74 = por %p72, %p73
    %p75 = scmp.ne.s32.totalorder %s67, %s70
    %p76 = scmp.eq.s32.totalorder %s8, 0
    %p77 = por %p75, %p76
    %p78 = scmp.ne.s32.totalorder %s67, %s70
    %p79 = scmp.eq.s32.totalorder %s13, 1
    %p80 = por %p78, %p79
    %p81 = scmp.ne.s32.totalorder %s70, %s71
    %p82 = scmp.eq.s32.totalorder %s13, 0
    %p83 = por %p81, %p82
    %p84 = scmp.ne.s32.totalorder %s70, %s71
    %p85 = scmp.eq.s32.totalorder %s14, 1
    %p86 = por %p84, %p85
    %p88 = scmp.ne.s32.totalorder %s71, %s87
    %p89 = scmp.eq.s32.totalorder %s14, 0
    %p90 = por %p88, %p89
    %s91 = ssub.s32 %s15, %s34
    %s92 = ssub.s32 %s16, %s30
    %s93 = sor.u32 %s91, %s92
    %p94 = scmp.eq.s32.totalorder %s93, 0
    %s96 = sadd.s32 %s95, 1
    %s97 = scalar_select %p94, %s95, %s96
    %p100 = pneg %p94
    %p101 = scmp.eq.s32.totalorder %s8, 1
    %p102 = por %p100, %p101
    %p103 = scmp.ne.s32.totalorder %s95, %s98
    %p104 = scmp.eq.s32.totalorder %s8, 0
    %p105 = por %p103, %p104
    %p106 = scmp.ne.s32.totalorder %s95, %s98
    %p107 = scmp.eq.s32.totalorder %s13, 1
    %p108 = por %p106, %p107
    %p109 = scmp.ne.s32.totalorder %s98, %s99
    %p110 = scmp.eq.s32.totalorder %s13, 0
    %p111 = por %p109, %p110
    %p112 = scmp.ne.s32.totalorder %s98, %s99
    %p113 = scmp.eq.s32.totalorder %s14, 1
    %p114 = por %p112, %p113
    %p116 = scmp.ne.s32.totalorder %s99, %s115
    %p117 = scmp.eq.s32.totalorder %s14, 0
    %p118 = por %p116, %p117
    %p119 = scmp.le.s32.totalorder 1, %s8
    %p120 = scmp.lt.s32.totalorder %s8, 3
    %p121 = pnand %p119, %p120
    %p122 = pneg %p121
    // Predicated region
    $region9: #{norm_dense_gcn_conv.2} parent=5 // pred_check
      _
    $region10: #{norm_dense_gcn_conv.2} parent=5 // pred_check_branch
      %124 = sbr.rel (%p121) target = $region12
    $region11: #{norm_dense_gcn_conv.2} parent=5 // pred_region
      %s125 = ssub.s32 %s8, 1
      // Predicated region
      $region13: #{norm_dense_gcn_conv.2} parent=11 // pred_check
        %p126 = pneg %p83
      $region14: #{norm_dense_gcn_conv.2} parent=11 // pred_check_branch
        %128 = sbr.rel (%p126) target = $region16
      $region15: #{norm_dense_gcn_conv.2} parent=11 // pred_region
        %s129 = smul.u32 16, %s20
        %p130 = scmp.lt.s32.totalorder %s129, 15
        %s131 = scalar_select %p130, %s129, 15
        %s132 = smul.addr %s131, 8
        %s133 = scalar_lea.vmem %s1, %s132
        %s134 = smul.u32 16, %s20
      $region16: #{norm_dense_gcn_conv.2} parent=11 // pred_fallthru
        _
    $region12: #{norm_dense_gcn_conv.2} parent=5 // pred_fallthru
      _
    %p135 = scmp.lt.s32.totalorder %s8, 2
    // Predicated region
    $region17: #{norm_dense_gcn_conv.2} parent=5 // pred_check
      %p136 = pneg %p135
    $region18: #{norm_dense_gcn_conv.2} parent=5 // pred_check_branch
      %138 = sbr.rel (%p136) target = $region20
    $region19: #{norm_dense_gcn_conv.2} parent=5 // pred_region
      // Predicated region
      $region21: #{norm_dense_gcn_conv.2} parent=19 // pred_check
        %p139 = pneg %p51
      $region22: #{norm_dense_gcn_conv.2} parent=19 // pred_check_branch
        %141 = sbr.rel (%p139) target = $region24
      $region23: #{norm_dense_gcn_conv.2} parent=19 // pred_region
        %s142 = smul.u32 16, %s16
        %p143 = scmp.lt.s32.totalorder %s15, 1
        %s144 = scalar_select %p143, %s15, 1
        %p145 = scmp.lt.s32.totalorder %s142, 15
        %s146 = scalar_select %p145, %s142, 15
        %p147 = scmp.lt.s32.totalorder %s17, 0
        %s148 = scalar_select %p147, %s17, 0
        %s149 = sadd.s32 %s148, %s146
        %s150 = smul.addr %s144, 16
        %s151 = sadd.s32 %s149, %s150
        %s152 = smul.addr %s151, 8
        %s153 = scalar_lea.vmem %s0, %s152
        %s154 = smul.u32 16, %s16
      $region24: #{norm_dense_gcn_conv.2} parent=19 // pred_fallthru
        _
    $region20: #{norm_dense_gcn_conv.2} parent=5 // pred_fallthru
      _
    %p155 = scmp.le.s32.totalorder 1, %s8
    %p156 = scmp.lt.s32.totalorder %s8, 3
    %p157 = pnand %p155, %p156
    %p158 = pneg %p157
    // Predicated region
    $region25: #{norm_dense_gcn_conv.2} parent=5 // pred_check
      _
    $region26: #{norm_dense_gcn_conv.2} parent=5 // pred_check_branch
      %160 = sbr.rel (%p157) target = $region28
    $region27: #{norm_dense_gcn_conv.2} parent=5 // pred_region
      %s161 = ssub.s32 %s8, 1
      %s162 = smul.u32 16, %s19
      %p163 = scmp.lt.s32.totalorder %s18, 1
      %s164 = scalar_select %p163, %s18, 1
      %p165 = scmp.lt.s32.totalorder %s162, 15
      %s166 = scalar_select %p165, %s162, 15
      %p167 = scmp.lt.s32.totalorder %s20, 0
      %s168 = scalar_select %p167, %s20, 0
      %s169 = sadd.s32 %s168, %s166
      %s170 = smul.addr %s164, 16
      %s171 = sadd.s32 %s169, %s170
      %s172 = smul.addr %s171, 8
      %s173 = scalar_lea.vmem %s0, %s172
      %p174 = pneg %p57
      %p175 = pneg %p54
      %s176 = smul.u32 16, %s20
      %p177 = scmp.lt.s32.totalorder %s176, 15
      %s178 = scalar_select %p177, %s176, 15
      %s179 = smul.addr %s178, 8
      %s180 = scalar_lea.vmem %s1, %s179
      %p181 = pneg %p83
      %p182 = pneg %p80
      %p183 = pneg %p111
      %p184 = pneg %p108
      %s185 = smul.u32 16, %s19
      %p186 = scmp.lt.s32.totalorder %s18, 1
      %s187 = scalar_select %p186, %s18, 1
      %p188 = scmp.lt.s32.totalorder %s185, 15
      %s189 = scalar_select %p188, %s185, 15
      %s190 = smul.addr %s187, 16
      %s191 = sadd.s32 %s189, %s190
      %s192 = smul.addr %s191, 4
      %s193 = scalar_lea.vmem %s2, %s192
      %s194 = smul.u32 16, %s19
      %p195 = scmp.lt.s32.totalorder %s18, 1
      %s196 = scalar_select %p195, %s18, 1
      %p197 = scmp.lt.s32.totalorder %s194, 15
      %s198 = scalar_select %p197, %s194, 15
      %p199 = scmp.lt.s32.totalorder %s20, 0
      %s200 = scalar_select %p199, %s20, 0
      %s201 = sadd.s32 %s200, %s198
      %s202 = smul.addr %s196, 16
      %s203 = sadd.s32 %s201, %s202
      %s204 = smul.addr %s203, 8
      %s205 = scalar_lea.vmem %s0, %s204
      %s206 = smul.u32 16, %s19
      %s207 = smul.u32 16, %s20
      %p208 = scmp.lt.s32.totalorder %s207, 15
      %s209 = scalar_select %p208, %s207, 15
      %s210 = smul.addr %s209, 8
      %s211 = scalar_lea.vmem %s1, %s210
      %s212 = smul.u32 16, %s20
      %s213 = smul.u32 16, %s19
      %p214 = scmp.lt.s32.totalorder %s18, 1
      %s215 = scalar_select %p214, %s18, 1
      %p216 = scmp.lt.s32.totalorder %s213, 15
      %s217 = scalar_select %p216, %s213, 15
      %s218 = smul.addr %s215, 16
      %s219 = sadd.s32 %s217, %s218
      %s220 = smul.addr %s219, 4
      %s221 = scalar_lea.vmem %s2, %s220
      %s222 = smul.u32 16, %s19
      %p223 = scmp.eq.s32.totalorder %s20, 0
      // Predicated region
      $region29: #{norm_dense_gcn_conv.2} parent=27 // pred_check
        %p224 = pneg %p223
      $region30: #{norm_dense_gcn_conv.2} parent=27 // pred_check_branch
        %226 = sbr.rel (%p224) target = $region32
      $region31: #{norm_dense_gcn_conv.2} parent=27 // pred_region
        %227 = vst [vmem:[#allocation2] sm:$0xff] 0.0
        %228 = vst [vmem:[#allocation2 + $0x8] sm:$0xff] 0.0
        %229 = vst [vmem:[#allocation2 + $0x10] sm:$0xff] 0.0
        %230 = vst [vmem:[#allocation2 + $0x18] sm:$0xff] 0.0
        %231 = vst [vmem:[#allocation2 + $0x20] sm:$0xff] 0.0
        %232 = vst [vmem:[#allocation2 + $0x28] sm:$0xff] 0.0
        %233 = vst [vmem:[#allocation2 + $0x30] sm:$0xff] 0.0
        %234 = vst [vmem:[#allocation2 + $0x38] sm:$0xff] 0.0
        %235 = vst [vmem:[#allocation2 + $0x40] sm:$0xff] 0.0
        %236 = vst [vmem:[#allocation2 + $0x48] sm:$0xff] 0.0
        %237 = vst [vmem:[#allocation2 + $0x50] sm:$0xff] 0.0
        %238 = vst [vmem:[#allocation2 + $0x58] sm:$0xff] 0.0
        %239 = vst [vmem:[#allocation2 + $0x60] sm:$0xff] 0.0
        %240 = vst [vmem:[#allocation2 + $0x68] sm:$0xff] 0.0
        %241 = vst [vmem:[#allocation2 + $0x70] sm:$0xff] 0.0
        %242 = vst [vmem:[#allocation2 + $0x78] sm:$0xff] 0.0
      $region32: #{norm_dense_gcn_conv.2} parent=27 // pred_fallthru
        _
      %v243 = vld [vmem:[#allocation2] sm:$0xff]
      %v244 = vld [vmem:[#allocation2 + $0x8] sm:$0xff]
      %v245 = vld [vmem:[#allocation2 + $0x10] sm:$0xff]
      %v246 = vld [vmem:[#allocation2 + $0x18] sm:$0xff]
      %v247 = vld [vmem:[#allocation2 + $0x20] sm:$0xff]
      %v248 = vld [vmem:[#allocation2 + $0x28] sm:$0xff]
      %v249 = vld [vmem:[#allocation2 + $0x30] sm:$0xff]
      %v250 = vld [vmem:[#allocation2 + $0x38] sm:$0xff]
      %v251 = vld [vmem:[#allocation2 + $0x40] sm:$0xff]
      %v252 = vld [vmem:[#allocation2 + $0x48] sm:$0xff]
      %v253 = vld [vmem:[#allocation2 + $0x50] sm:$0xff]
      %v254 = vld [vmem:[#allocation2 + $0x58] sm:$0xff]
      %v255 = vld [vmem:[#allocation2 + $0x60] sm:$0xff]
      %v256 = vld [vmem:[#allocation2 + $0x68] sm:$0xff]
      %v257 = vld [vmem:[#allocation2 + $0x70] sm:$0xff]
      %v258 = vld [vmem:[#allocation2 + $0x78] sm:$0xff]
      %v259 = vld [vmem:[%s205] sm:$0xff]
      %v260 = vld [vmem:[%s205 + $0x8] sm:$0xff]
      %v261 = vld [vmem:[%s205 + $0x10] sm:$0xff]
      %v262 = vld [vmem:[%s205 + $0x18] sm:$0xff]
      %v263 = vld [vmem:[%s205 + $0x20] sm:$0xff]
      %v264 = vld [vmem:[%s205 + $0x28] sm:$0xff]
      %v265 = vld [vmem:[%s205 + $0x30] sm:$0xff]
      %v266 = vld [vmem:[%s205 + $0x38] sm:$0xff]
      %v267 = vld [vmem:[%s205 + $0x40] sm:$0xff]
      %v268 = vld [vmem:[%s205 + $0x48] sm:$0xff]
      %v269 = vld [vmem:[%s205 + $0x50] sm:$0xff]
      %v270 = vld [vmem:[%s205 + $0x58] sm:$0xff]
      %v271 = vld [vmem:[%s205 + $0x60] sm:$0xff]
      %v272 = vld [vmem:[%s205 + $0x68] sm:$0xff]
      %v273 = vld [vmem:[%s205 + $0x70] sm:$0xff]
      %v274 = vld [vmem:[%s205 + $0x78] sm:$0xff]
      %v275 = vld [vmem:[%s211] sm:$0xff]
      %v276 = vld [vmem:[%s211 + $0x8] sm:$0xff]
      %v277 = vld [vmem:[%s211 + $0x10] sm:$0xff]
      %v278 = vld [vmem:[%s211 + $0x18] sm:$0xff]
      %v279 = vld [vmem:[%s211 + $0x20] sm:$0xff]
      %v280 = vld [vmem:[%s211 + $0x28] sm:$0xff]
      %v281 = vld [vmem:[%s211 + $0x30] sm:$0xff]
      %v282 = vld [vmem:[%s211 + $0x38] sm:$0xff]
      %v283 = vld [vmem:[%s211 + $0x40] sm:$0xff]
      %v284 = vld [vmem:[%s211 + $0x48] sm:$0xff]
      %v285 = vld [vmem:[%s211 + $0x50] sm:$0xff]
      %v286 = vld [vmem:[%s211 + $0x58] sm:$0xff]
      %v287 = vld [vmem:[%s211 + $0x60] sm:$0xff]
      %v288 = vld [vmem:[%s211 + $0x68] sm:$0xff]
      %v289 = vld [vmem:[%s211 + $0x70] sm:$0xff]
      %v290 = vld [vmem:[%s211 + $0x78] sm:$0xff]
      %291 = vmatprep.subr.mxu0 0.0
      %292 = vmatpush1.msra.mxu0 %v290
      %293 = vmatprep.subr.mxu0 0.0
      %294 = vmatpush1.msra.mxu0 %v289
      %295 = vmatprep.subr.mxu0 0.0
      %296 = vmatpush1.msra.mxu0 %v288
      %297 = vmatprep.subr.mxu0 0.0
      %298 = vmatpush1.msra.mxu0 %v287
      %299 = vmatprep.subr.mxu0 0.0
      %300 = vmatpush1.msra.mxu0 %v286
      %301 = vmatprep.subr.mxu0 0.0
      %302 = vmatpush1.msra.mxu0 %v285
      %303 = vmatprep.subr.mxu0 0.0
      %304 = vmatpush1.msra.mxu0 %v284
      %305 = vmatprep.subr.mxu0 0.0
      %306 = vmatpush1.msra.mxu0 %v283
      %307 = vmatprep.subr.mxu0 0.0
      %308 = vmatpush1.msra.mxu0 %v282
      %309 = vmatprep.subr.mxu0 0.0
      %310 = vmatpush1.msra.mxu0 %v281
      %311 = vmatprep.subr.mxu0 0.0
      %312 = vmatpush1.msra.mxu0 %v280
      %313 = vmatprep.subr.mxu0 0.0
      %314 = vmatpush1.msra.mxu0 %v279
      %315 = vmatprep.subr.mxu0 0.0
      %316 = vmatpush1.msra.mxu0 %v278
      %317 = vmatprep.subr.mxu0 0.0
      %318 = vmatpush1.msra.mxu0 %v277
      %319 = vmatprep.subr.mxu0 0.0
      %320 = vmatpush1.msra.mxu0 %v276
      %321 = vmatprep.subr.mxu0 0.0
      %322 = vmatpush1.msra.mxu0 %v275
      %323 = vmatprep.subr.mxu0 0.0
      %324 = vmatpush2.msra.mxu0 0.0
      %325 = vmatprep.subr.mxu0 0.0
      %326 = vmatpush2.msra.mxu0 0.0
      %327 = vmatprep.subr.mxu0 0.0
      %328 = vmatpush2.msra.mxu0 0.0
      %329 = vmatprep.subr.mxu0 0.0
      %330 = vmatpush2.msra.mxu0 0.0
      %331 = vmatprep.subr.mxu0 0.0
      %332 = vmatpush2.msra.mxu0 0.0
      %333 = vmatprep.subr.mxu0 0.0
      %334 = vmatpush2.msra.mxu0 0.0
      %335 = vmatprep.subr.mxu0 0.0
      %336 = vmatpush2.msra.mxu0 0.0
      %337 = vmatprep.subr.mxu0 0.0
      %338 = vmatpush2.msra.mxu0 0.0
      %339 = vmatprep.subr.mxu0 0.0
      %340 = vmatpush2.msra.mxu0 0.0
      %341 = vmatprep.subr.mxu0 0.0
      %342 = vmatpush2.msra.mxu0 0.0
      %343 = vmatprep.subr.mxu0 0.0
      %344 = vmatpush2.msra.mxu0 0.0
      %345 = vmatprep.subr.mxu0 0.0
      %346 = vmatpush2.msra.mxu0 0.0
      %347 = vmatprep.subr.mxu0 0.0
      %348 = vmatpush2.msra.mxu0 0.0
      %349 = vmatprep.subr.mxu0 0.0
      %350 = vmatpush2.msra.mxu0 0.0
      %351 = vmatprep.subr.mxu0 0.0
      %352 = vmatpush2.msra.mxu0 0.0
      %353 = vmatprep.subr.mxu0 0.0
      %354 = vmatpush2.msra.mxu0 0.0
      %355 = vmatprep.mubr.f32.mxu0 0.0
      %356 = vmatmul.mubr.f32.gmra.mxu0 %v259
      %v357 = vpop.f32.mrf.mxu0
      %v358 = vadd.f32 0.0, %v357
      %v359 = vpop.f32.mrf.mxu0
      %360 = vmatprep.mubr.f32.mxu0 0.0
      %361 = vmatmul.mubr.f32.gmra.mxu0 %v260
      %v362 = vpop.f32.mrf.mxu0
      %v363 = vadd.f32 0.0, %v362
      %v364 = vpop.f32.mrf.mxu0
      %365 = vmatprep.mubr.f32.mxu0 0.0
      %366 = vmatmul.mubr.f32.gmra.mxu0 %v261
      %v367 = vpop.f32.mrf.mxu0
      %v368 = vadd.f32 0.0, %v367
      %v369 = vpop.f32.mrf.mxu0
      %370 = vmatprep.mubr.f32.mxu0 0.0
      %371 = vmatmul.mubr.f32.gmra.mxu0 %v262
      %v372 = vpop.f32.mrf.mxu0
      %v373 = vadd.f32 0.0, %v372
      %v374 = vpop.f32.mrf.mxu0
      %375 = vmatprep.mubr.f32.mxu0 0.0
      %376 = vmatmul.mubr.f32.gmra.mxu0 %v263
      %v377 = vpop.f32.mrf.mxu0
      %v378 = vadd.f32 0.0, %v377
      %v379 = vpop.f32.mrf.mxu0
      %380 = vmatprep.mubr.f32.mxu0 0.0
      %381 = vmatmul.mubr.f32.gmra.mxu0 %v264
      %v382 = vpop.f32.mrf.mxu0
      %v383 = vadd.f32 0.0, %v382
      %v384 = vpop.f32.mrf.mxu0
      %385 = vmatprep.mubr.f32.mxu0 0.0
      %386 = vmatmul.mubr.f32.gmra.mxu0 %v265
      %v387 = vpop.f32.mrf.mxu0
      %v388 = vadd.f32 0.0, %v387
      %v389 = vpop.f32.mrf.mxu0
      %390 = vmatprep.mubr.f32.mxu0 0.0
      %391 = vmatmul.mubr.f32.gmra.mxu0 %v266
      %v392 = vpop.f32.mrf.mxu0
      %v393 = vadd.f32 0.0, %v392
      %v394 = vpop.f32.mrf.mxu0
      %395 = vmatprep.mubr.f32.mxu0 0.0
      %396 = vmatmul.mubr.f32.gmra.mxu0 %v267
      %v397 = vpop.f32.mrf.mxu0
      %v398 = vadd.f32 0.0, %v397
      %v399 = vpop.f32.mrf.mxu0
      %400 = vmatprep.mubr.f32.mxu0 0.0
      %401 = vmatmul.mubr.f32.gmra.mxu0 %v268
      %v402 = vpop.f32.mrf.mxu0
      %v403 = vadd.f32 0.0, %v402
      %v404 = vpop.f32.mrf.mxu0
      %405 = vmatprep.mubr.f32.mxu0 0.0
      %406 = vmatmul.mubr.f32.gmra.mxu0 %v269
      %v407 = vpop.f32.mrf.mxu0
      %v408 = vadd.f32 0.0, %v407
      %v409 = vpop.f32.mrf.mxu0
      %410 = vmatprep.mubr.f32.mxu0 0.0
      %411 = vmatmul.mubr.f32.gmra.mxu0 %v270
      %v412 = vpop.f32.mrf.mxu0
      %v413 = vadd.f32 0.0, %v412
      %v414 = vpop.f32.mrf.mxu0
      %415 = vmatprep.mubr.f32.mxu0 0.0
      %416 = vmatmul.mubr.f32.gmra.mxu0 %v271
      %v417 = vpop.f32.mrf.mxu0
      %v418 = vadd.f32 0.0, %v417
      %v419 = vpop.f32.mrf.mxu0
      %420 = vmatprep.mubr.f32.mxu0 0.0
      %421 = vmatmul.mubr.f32.gmra.mxu0 %v272
      %v422 = vpop.f32.mrf.mxu0
      %v423 = vadd.f32 0.0, %v422
      %v424 = vpop.f32.mrf.mxu0
      %425 = vmatprep.mubr.f32.mxu0 0.0
      %426 = vmatmul.mubr.f32.gmra.mxu0 %v273
      %v427 = vpop.f32.mrf.mxu0
      %v428 = vadd.f32 0.0, %v427
      %v429 = vpop.f32.mrf.mxu0
      %430 = vmatprep.mubr.f32.mxu0 0.0
      %431 = vmatmul.mubr.f32.gmra.mxu0 %v274
      %v432 = vpop.f32.mrf.mxu0
      %v433 = vadd.f32 0.0, %v432
      %v434 = vpop.f32.mrf.mxu0
      %435 = vdwg.mxu0
      %v436 = vadd.f32 %v243, %v358
      %v437 = vadd.f32 %v244, %v363
      %v438 = vadd.f32 %v245, %v368
      %v439 = vadd.f32 %v246, %v373
      %v440 = vadd.f32 %v247, %v378
      %v441 = vadd.f32 %v248, %v383
      %v442 = vadd.f32 %v249, %v388
      %v443 = vadd.f32 %v250, %v393
      %v444 = vadd.f32 %v251, %v398
      %v445 = vadd.f32 %v252, %v403
      %v446 = vadd.f32 %v253, %v408
      %v447 = vadd.f32 %v254, %v413
      %v448 = vadd.f32 %v255, %v418
      %v449 = vadd.f32 %v256, %v423
      %v450 = vadd.f32 %v257, %v428
      %v451 = vadd.f32 %v258, %v433
      %452 = vst [vmem:[#allocation2] sm:$0xff] %v436
      %453 = vst [vmem:[#allocation2 + $0x8] sm:$0xff] %v437
      %454 = vst [vmem:[#allocation2 + $0x10] sm:$0xff] %v438
      %455 = vst [vmem:[#allocation2 + $0x18] sm:$0xff] %v439
      %456 = vst [vmem:[#allocation2 + $0x20] sm:$0xff] %v440
      %457 = vst [vmem:[#allocation2 + $0x28] sm:$0xff] %v441
      %458 = vst [vmem:[#allocation2 + $0x30] sm:$0xff] %v442
      %459 = vst [vmem:[#allocation2 + $0x38] sm:$0xff] %v443
      %460 = vst [vmem:[#allocation2 + $0x40] sm:$0xff] %v444
      %461 = vst [vmem:[#allocation2 + $0x48] sm:$0xff] %v445
      %462 = vst [vmem:[#allocation2 + $0x50] sm:$0xff] %v446
      %463 = vst [vmem:[#allocation2 + $0x58] sm:$0xff] %v447
      %464 = vst [vmem:[#allocation2 + $0x60] sm:$0xff] %v448
      %465 = vst [vmem:[#allocation2 + $0x68] sm:$0xff] %v449
      %466 = vst [vmem:[#allocation2 + $0x70] sm:$0xff] %v450
      %467 = vst [vmem:[#allocation2 + $0x78] sm:$0xff] %v451
      // Predicated region
      $region33: #{norm_dense_gcn_conv.2} parent=27 // pred_check
        %p468 = pneg %p223
      $region34: #{norm_dense_gcn_conv.2} parent=27 // pred_check_branch
        %470 = sbr.rel (%p468) target = $region36
      $region35: #{norm_dense_gcn_conv.2} parent=27 // pred_region
        %v471 = vld [vmem:[#allocation2] sm:$0xff]
        %v472 = vld [vmem:[#allocation2 + $0x8] sm:$0xff]
        %v473 = vld [vmem:[#allocation2 + $0x10] sm:$0xff]
        %v474 = vld [vmem:[#allocation2 + $0x18] sm:$0xff]
        %v475 = vld [vmem:[#allocation2 + $0x20] sm:$0xff]
        %v476 = vld [vmem:[#allocation2 + $0x28] sm:$0xff]
        %v477 = vld [vmem:[#allocation2 + $0x30] sm:$0xff]
        %v478 = vld [vmem:[#allocation2 + $0x38] sm:$0xff]
        %v479 = vld [vmem:[#allocation2 + $0x40] sm:$0xff]
        %v480 = vld [vmem:[#allocation2 + $0x48] sm:$0xff]
        %v481 = vld [vmem:[#allocation2 + $0x50] sm:$0xff]
        %v482 = vld [vmem:[#allocation2 + $0x58] sm:$0xff]
        %v483 = vld [vmem:[#allocation2 + $0x60] sm:$0xff]
        %v484 = vld [vmem:[#allocation2 + $0x68] sm:$0xff]
        %v485 = vld [vmem:[#allocation2 + $0x70] sm:$0xff]
        %v486 = vld [vmem:[#allocation2 + $0x78] sm:$0xff]
        %v487 = vpack.c.bf16 %v472, %v471
        %v488 = vpack.c.bf16 %v474, %v473
        %v489 = vpack.c.bf16 %v476, %v475
        %v490 = vpack.c.bf16 %v478, %v477
        %v491 = vpack.c.bf16 %v480, %v479
        %v492 = vpack.c.bf16 %v482, %v481
        %v493 = vpack.c.bf16 %v484, %v483
        %v494 = vpack.c.bf16 %v486, %v485
        %v503 = vunpack.c.l.b16 %v487
        %v504 = vunpack.c.h.b16 %v487
        %v505 = vunpack.c.l.b16 %v488
        %v506 = vunpack.c.h.b16 %v488
        %v507 = vunpack.c.l.b16 %v489
        %v508 = vunpack.c.h.b16 %v489
        %v509 = vunpack.c.l.b16 %v490
        %v510 = vunpack.c.h.b16 %v490
        %v511 = vunpack.c.l.b16 %v491
        %v512 = vunpack.c.h.b16 %v491
        %v513 = vunpack.c.l.b16 %v492
        %v514 = vunpack.c.h.b16 %v492
        %v515 = vunpack.c.l.b16 %v493
        %v516 = vunpack.c.h.b16 %v493
        %v517 = vunpack.c.l.b16 %v494
        %v518 = vunpack.c.h.b16 %v494
        %v519 = vpack.c.b16 %v503, %v503
        %v520 = vpack.c.b16 %v504, %v504
        %v521 = vpack.c.b16 %v505, %v505
        %v522 = vpack.c.b16 %v506, %v506
        %v523 = vpack.c.b16 %v507, %v507
        %v524 = vpack.c.b16 %v508, %v508
        %v525 = vpack.c.b16 %v509, %v509
        %v526 = vpack.c.b16 %v510, %v510
        %v527 = vpack.c.b16 %v511, %v511
        %v528 = vpack.c.b16 %v512, %v512
        %v529 = vpack.c.b16 %v513, %v513
        %v530 = vpack.c.b16 %v514, %v514
        %v531 = vpack.c.b16 %v515, %v515
        %v532 = vpack.c.b16 %v516, %v516
        %v533 = vpack.c.b16 %v517, %v517
        %v534 = vpack.c.b16 %v518, %v518
        %551 = vst [vmem:[%s221] sm:$0xf] %v519
        %552 = vst [vmem:[%s221 + $0x4] sm:$0xf] %v520
        %553 = vst [vmem:[%s221 + $0x8] sm:$0xf] %v521
        %554 = vst [vmem:[%s221 + $0xc] sm:$0xf] %v522
        %555 = vst [vmem:[%s221 + $0x10] sm:$0xf] %v523
        %556 = vst [vmem:[%s221 + $0x14] sm:$0xf] %v524
        %557 = vst [vmem:[%s221 + $0x18] sm:$0xf] %v525
        %558 = vst [vmem:[%s221 + $0x1c] sm:$0xf] %v526
        %559 = vst [vmem:[%s221 + $0x20] sm:$0xf] %v527
        %560 = vst [vmem:[%s221 + $0x24] sm:$0xf] %v528
        %561 = vst [vmem:[%s221 + $0x28] sm:$0xf] %v529
        %562 = vst [vmem:[%s221 + $0x2c] sm:$0xf] %v530
        %563 = vst [vmem:[%s221 + $0x30] sm:$0xf] %v531
        %564 = vst [vmem:[%s221 + $0x34] sm:$0xf] %v532
        %565 = vst [vmem:[%s221 + $0x38] sm:$0xf] %v533
        %566 = vst [vmem:[%s221 + $0x3c] sm:$0xf] %v534
      $region36: #{norm_dense_gcn_conv.2} parent=27 // pred_fallthru
        _
      %s567 = smul.u32 16, %s19
      %p568 = scmp.lt.s32.totalorder %s18, 1
      %s569 = scalar_select %p568, %s18, 1
      %p570 = scmp.lt.s32.totalorder %s567, 15
      %s571 = scalar_select %p570, %s567, 15
      %s572 = smul.addr %s569, 16
      %s573 = sadd.s32 %s571, %s572
      %s574 = smul.addr %s573, 4
      %s575 = scalar_lea.vmem %s2, %s574
      // Predicated region
      $region37: #{norm_dense_gcn_conv.2} parent=27 // pred_check
        %p576 = pneg %p108
      $region38: #{norm_dense_gcn_conv.2} parent=27 // pred_check_branch
        %578 = sbr.rel (%p576) target = $region40
      $region39: #{norm_dense_gcn_conv.2} parent=27 // pred_region
        %s579 = smul.u32 16, %s19
      $region40: #{norm_dense_gcn_conv.2} parent=27 // pred_fallthru
        _
    $region28: #{norm_dense_gcn_conv.2} parent=5 // pred_fallthru
      _
    %p580 = scmp.le.s32.totalorder 2, %s8
    // Predicated region
    $region41: #{norm_dense_gcn_conv.2} parent=5 // pred_check
      %p581 = pneg %p580
    $region42: #{norm_dense_gcn_conv.2} parent=5 // pred_check_branch
      %583 = sbr.rel (%p581) target = $region44
    $region43: #{norm_dense_gcn_conv.2} parent=5 // pred_region
      %s584 = ssub.s32 %s8, 2
      // Predicated region
      $region45: #{norm_dense_gcn_conv.2} parent=43 // pred_check
        %p585 = pneg %p114
      $region46: #{norm_dense_gcn_conv.2} parent=43 // pred_check_branch
        %587 = sbr.rel (%p585) target = $region48
      $region47: #{norm_dense_gcn_conv.2} parent=43 // pred_region
        %s588 = smul.u32 16, %s22
        %p589 = scmp.lt.s32.totalorder %s21, 1
        %s590 = scalar_select %p589, %s21, 1
        %p591 = scmp.lt.s32.totalorder %s588, 15
        %s592 = scalar_select %p591, %s588, 15
        %s593 = smul.addr %s590, 16
        %s594 = sadd.s32 %s592, %s593
        %s595 = smul.addr %s594, 4
        %s596 = scalar_lea.vmem %s2, %s595
      $region48: #{norm_dense_gcn_conv.2} parent=43 // pred_fallthru
        _
    $region44: #{norm_dense_gcn_conv.2} parent=5 // pred_fallthru
      _
  $region6: #{norm_dense_gcn_conv.2} parent=0 // loop_footer
    %s12 = sadd.s32 1, %s8
  $region7: #{norm_dense_gcn_conv.2} parent=0 // loop_footer_branch
    %7 = sbr.rel target = $region3
  $region8: #{norm_dense_gcn_conv.2} parent=0 // loop_exit
    _

// kernel: norm_dense_gcn_conv.3
$region0: #{norm_dense_gcn_conv.3}
  #allocation0 [shape = 'u32[]', space=smem, size = 0x4, offset = 0x4, fixed_abs, tag = 'smem constant byte address 0x4 - core index']
  #allocation1 [shape = 'u32[144,128]{1,0:T(1,128)}', space=vmem, size = 0x12000, scoped, tag = 'internal scratch']
  %s0 = inlined_call_operand.vmem [shape: bf16[2,128,128], index: 0, kind: input, shape index: {}]
  %s1 = inlined_call_operand.vmem [shape: bf16[2,128,128], index: 1, kind: input, shape index: {}, may-alias: {1,3}]
  %s2 = inlined_call_operand.vmem [shape: f32[2,128,1], index: 2, kind: input, shape index: {}, may-alias: {2,4}]
  %s3 = inlined_call_operand.vmem [shape: bf16[2,128,128], index: 3, kind: input, shape index: {}, may-alias: {1,3}]
  %s4 = inlined_call_operand.vmem [shape: f32[2,128,1], index: 4, kind: input, shape index: {}, may-alias: {2,4}]
  %s5 = inlined_call_operand.vmem [shape: f32[2,128,1], index: 5, kind: input, shape index: {}]
  %s6 = inlined_call_operand.vmem [shape: f32[1,128], index: 6, kind: input, shape index: {}]
  %s7 = inlined_call_operand.vmem [shape: f32[2,128,128], index: 7, kind: output, shape index: {}]
  %s8 = sld [smem:[#allocation0]]
  $region69: #{norm_dense_gcn_conv.3} parent=0
    _
  %s10 = ssub.s32 1, %s8
  %s11 = scalar_select 0, %s10, %s8
  loop: start=0, step=1, limit=4
  $region2: #{norm_dense_gcn_conv.3} parent=0 // loop_pre_header
    _
  $region3: #{norm_dense_gcn_conv.3} parent=0 // loop_header
    %s13 = sphi 0, %s17
    %p14 = scmp.ge.s32.totalorder %s13, 4
    %s20 = sphi 0, %s39
    %s21 = sphi 0, %s35
    %s22 = sphi 0, %s31
    %s23 = sphi 0, %s20
    %s24 = sphi 0, %s21
    %s25 = sphi 0, %s22
    %s26 = sphi 0, %s23
    %s27 = sphi 0, %s24
    %s28 = sphi 0, %s25
    %s46 = sphi 0, %s48
    %s49 = sphi 0, %s46
    %s50 = sphi 0, %s49
    %s66 = sphi 0, %s50
    %s74 = sphi 0, %s76
    %s77 = sphi 0, %s74
    %s78 = sphi 0, %s77
    %s94 = sphi 0, %s78
    %s102 = sphi 0, %s104
    %s105 = sphi 0, %s102
    %s106 = sphi 0, %s105
    %s122 = sphi 0, %s106
    %s130 = sphi 0, %s132
    %s133 = sphi 0, %s130
    %s134 = sphi 0, %s133
    %s150 = sphi 0, %s134
    %s158 = sphi 0, %s160
    %s161 = sphi 0, %s158
    %s162 = sphi 0, %s161
    %s178 = sphi 0, %s162
    %s186 = sphi 0, %s188
    %s189 = sphi 0, %s186
    %s190 = sphi 0, %s189
    %s206 = sphi 0, %s190
    %s210 = sphi 0, %s210
    %s212 = sphi 0, %s210
    %s213 = sphi 0, %s212
    %s227 = sphi 0, %s213
    %s235 = sphi 0, %s237
    %s238 = sphi 0, %s235
    %s239 = sphi 0, %s238
    %s255 = sphi 0, %s239
  $region4: #{norm_dense_gcn_conv.3} parent=0 // loop_header_branch
    %16 = sbr.rel (%p14) target = $region8
  $region5: #{norm_dense_gcn_conv.3} parent=0 // loop_body
    %s18 = ssub.s32 %s13, 1
    %s19 = ssub.s32 %s13, 2
    %s29 = sadd.s32 1, %s22
    %p30 = scmp.ge.s32.totalorder %s29, 1
    %s31 = scalar_select %p30, 0, %s29
    %s32 = sadd.s32 1, %s21
    %s33 = scalar_select %p30, %s32, %s21
    %p34 = scmp.ge.s32.totalorder %s33, 1
    %s35 = scalar_select %p34, 0, %s33
    %s36 = sadd.s32 1, %s20
    %s37 = scalar_select %p34, %s36, %s20
    %p38 = scmp.ge.s32.totalorder %s37, 2
    %s39 = scalar_select %p38, 0, %s37
    %s40 = ssub.s32 %s20, %s39
    %s41 = ssub.s32 %s21, %s35
    %s42 = sor.u32 %s40, %s41
    %s43 = ssub.s32 %s22, %s31
    %s44 = sor.u32 %s42, %s43
    %p45 = scmp.eq.s32.totalorder %s44, 0
    %s47 = sadd.s32 %s46, 1
    %s48 = scalar_select %p45, %s46, %s47
    %p51 = pneg %p45
    %p52 = scmp.eq.s32.totalorder %s13, 1
    %p53 = por %p51, %p52
    %p54 = scmp.ne.s32.totalorder %s46, %s49
    %p55 = scmp.eq.s32.totalorder %s13, 0
    %p56 = por %p54, %p55
    %p57 = scmp.ne.s32.totalorder %s46, %s49
    %p58 = scmp.eq.s32.totalorder %s18, 1
    %p59 = por %p57, %p58
    %p60 = scmp.ne.s32.totalorder %s49, %s50
    %p61 = scmp.eq.s32.totalorder %s18, 0
    %p62 = por %p60, %p61
    %p63 = scmp.ne.s32.totalorder %s49, %s50
    %p64 = scmp.eq.s32.totalorder %s19, 1
    %p65 = por %p63, %p64
    %p67 = scmp.ne.s32.totalorder %s50, %s66
    %p68 = scmp.eq.s32.totalorder %s19, 0
    %p69 = por %p67, %p68
    %s70 = ssub.s32 %s20, %s39
    %s71 = ssub.s32 %s22, %s31
    %s72 = sor.u32 %s70, %s71
    %p73 = scmp.eq.s32.totalorder %s72, 0
    %s75 = sadd.s32 %s74, 1
    %s76 = scalar_select %p73, %s74, %s75
    %p79 = pneg %p73
    %p80 = scmp.eq.s32.totalorder %s13, 1
    %p81 = por %p79, %p80
    %p82 = scmp.ne.s32.totalorder %s74, %s77
    %p83 = scmp.eq.s32.totalorder %s13, 0
    %p84 = por %p82, %p83
    %p85 = scmp.ne.s32.totalorder %s74, %s77
    %p86 = scmp.eq.s32.totalorder %s18, 1
    %p87 = por %p85, %p86
    %p88 = scmp.ne.s32.totalorder %s77, %s78
    %p89 = scmp.eq.s32.totalorder %s18, 0
    %p90 = por %p88, %p89
    %p91 = scmp.ne.s32.totalorder %s77, %s78
    %p92 = scmp.eq.s32.totalorder %s19, 1
    %p93 = por %p91, %p92
    %p95 = scmp.ne.s32.totalorder %s78, %s94
    %p96 = scmp.eq.s32.totalorder %s19, 0
    %p97 = por %p95, %p96
    %s98 = ssub.s32 %s20, %s39
    %s99 = ssub.s32 %s22, %s31
    %s100 = sor.u32 %s98, %s99
    %p101 = scmp.eq.s32.totalorder %s100, 0
    %s103 = sadd.s32 %s102, 1
    %s104 = scalar_select %p101, %s102, %s103
    %p107 = pneg %p101
    %p108 = scmp.eq.s32.totalorder %s13, 1
    %p109 = por %p107, %p108
    %p110 = scmp.ne.s32.totalorder %s102, %s105
    %p111 = scmp.eq.s32.totalorder %s13, 0
    %p112 = por %p110, %p111
    %p113 = scmp.ne.s32.totalorder %s102, %s105
    %p114 = scmp.eq.s32.totalorder %s18, 1
    %p115 = por %p113, %p114
    %p116 = scmp.ne.s32.totalorder %s105, %s106
    %p117 = scmp.eq.s32.totalorder %s18, 0
    %p118 = por %p116, %p117
    %p119 = scmp.ne.s32.totalorder %s105, %s106
    %p120 = scmp.eq.s32.totalorder %s19, 1
    %p121 = por %p119, %p120
    %p123 = scmp.ne.s32.totalorder %s106, %s122
    %p124 = scmp.eq.s32.totalorder %s19, 0
    %p125 = por %p123, %p124
    %s126 = ssub.s32 %s20, %s39
    %s127 = ssub.s32 %s21, %s35
    %s128 = sor.u32 %s126, %s127
    %p129 = scmp.eq.s32.totalorder %s128, 0
    %s131 = sadd.s32 %s130, 1
    %s132 = scalar_select %p129, %s130, %s131
    %p135 = pneg %p129
    %p136 = scmp.eq.s32.totalorder %s13, 1
    %p137 = por %p135, %p136
    %p138 = scmp.ne.s32.totalorder %s130, %s133
    %p139 = scmp.eq.s32.totalorder %s13, 0
    %p140 = por %p138, %p139
    %p141 = scmp.ne.s32.totalorder %s130, %s133
    %p142 = scmp.eq.s32.totalorder %s18, 1
    %p143 = por %p141, %p142
    %p144 = scmp.ne.s32.totalorder %s133, %s134
    %p145 = scmp.eq.s32.totalorder %s18, 0
    %p146 = por %p144, %p145
    %p147 = scmp.ne.s32.totalorder %s133, %s134
    %p148 = scmp.eq.s32.totalorder %s19, 1
    %p149 = por %p147, %p148
    %p151 = scmp.ne.s32.totalorder %s134, %s150
    %p152 = scmp.eq.s32.totalorder %s19, 0
    %p153 = por %p151, %p152
    %s154 = ssub.s32 %s20, %s39
    %s155 = ssub.s32 %s21, %s35
    %s156 = sor.u32 %s154, %s155
    %p157 = scmp.eq.s32.totalorder %s156, 0
    %s159 = sadd.s32 %s158, 1
    %s160 = scalar_select %p157, %s158, %s159
    %p163 = pneg %p157
    %p164 = scmp.eq.s32.totalorder %s13, 1
    %p165 = por %p163, %p164
    %p166 = scmp.ne.s32.totalorder %s158, %s161
    %p167 = scmp.eq.s32.totalorder %s13, 0
    %p168 = por %p166, %p167
    %p169 = scmp.ne.s32.totalorder %s158, %s161
    %p170 = scmp.eq.s32.totalorder %s18, 1
    %p171 = por %p169, %p170
    %p172 = scmp.ne.s32.totalorder %s161, %s162
    %p173 = scmp.eq.s32.totalorder %s18, 0
    %p174 = por %p172, %p173
    %p175 = scmp.ne.s32.totalorder %s161, %s162
    %p176 = scmp.eq.s32.totalorder %s19, 1
    %p177 = por %p175, %p176
    %p179 = scmp.ne.s32.totalorder %s162, %s178
    %p180 = scmp.eq.s32.totalorder %s19, 0
    %p181 = por %p179, %p180
    %s182 = ssub.s32 %s20, %s39
    %s183 = ssub.s32 %s21, %s35
    %s184 = sor.u32 %s182, %s183
    %p185 = scmp.eq.s32.totalorder %s184, 0
    %s187 = sadd.s32 %s186, 1
    %s188 = scalar_select %p185, %s186, %s187
    %p191 = pneg %p185
    %p192 = scmp.eq.s32.totalorder %s13, 1
    %p193 = por %p191, %p192
    %p194 = scmp.ne.s32.totalorder %s186, %s189
    %p195 = scmp.eq.s32.totalorder %s13, 0
    %p196 = por %p194, %p195
    %p197 = scmp.ne.s32.totalorder %s186, %s189
    %p198 = scmp.eq.s32.totalorder %s18, 1
    %p199 = por %p197, %p198
    %p200 = scmp.ne.s32.totalorder %s189, %s190
    %p201 = scmp.eq.s32.totalorder %s18, 0
    %p202 = por %p200, %p201
    %p203 = scmp.ne.s32.totalorder %s189, %s190
    %p204 = scmp.eq.s32.totalorder %s19, 1
    %p205 = por %p203, %p204
    %p207 = scmp.ne.s32.totalorder %s190, %s206
    %p208 = scmp.eq.s32.totalorder %s19, 0
    %p209 = por %p207, %p208
    %s211 = sadd.s32 %s210, 1
    %p214 = scmp.eq.s32.totalorder %s13, 1
    %p215 = scmp.ne.s32.totalorder %s210, %s212
    %p216 = scmp.eq.s32.totalorder %s13, 0
    %p217 = por %p215, %p216
    %p218 = scmp.ne.s32.totalorder %s210, %s212
    %p219 = scmp.eq.s32.totalorder %s18, 1
    %p220 = por %p218, %p219
    %p221 = scmp.ne.s32.totalorder %s212, %s213
    %p222 = scmp.eq.s32.totalorder %s18, 0
    %p223 = por %p221, %p222
    %p224 = scmp.ne.s32.totalorder %s212, %s213
    %p225 = scmp.eq.s32.totalorder %s19, 1
    %p226 = por %p224, %p225
    %p228 = scmp.ne.s32.totalorder %s213, %s227
    %p229 = scmp.eq.s32.totalorder %s19, 0
    %p230 = por %p228, %p229
    %s231 = ssub.s32 %s20, %s39
    %s232 = ssub.s32 %s21, %s35
    %s233 = sor.u32 %s231, %s232
    %p234 = scmp.eq.s32.totalorder %s233, 0
    %s236 = sadd.s32 %s235, 1
    %s237 = scalar_select %p234, %s235, %s236
    %p240 = pneg %p234
    %p241 = scmp.eq.s32.totalorder %s13, 1
    %p242 = por %p240, %p241
    %p243 = scmp.ne.s32.totalorder %s235, %s238
    %p244 = scmp.eq.s32.totalorder %s13, 0
    %p245 = por %p243, %p244
    %p246 = scmp.ne.s32.totalorder %s235, %s238
    %p247 = scmp.eq.s32.totalorder %s18, 1
    %p248 = por %p246, %p247
    %p249 = scmp.ne.s32.totalorder %s238, %s239
    %p250 = scmp.eq.s32.totalorder %s18, 0
    %p251 = por %p249, %p250
    %p252 = scmp.ne.s32.totalorder %s238, %s239
    %p253 = scmp.eq.s32.totalorder %s19, 1
    %p254 = por %p252, %p253
    %p256 = scmp.ne.s32.totalorder %s239, %s255
    %p257 = scmp.eq.s32.totalorder %s19, 0
    %p258 = por %p256, %p257
    %p259 = scmp.le.s32.totalorder 1, %s13
    %p260 = scmp.lt.s32.totalorder %s13, 3
    %p261 = pnand %p259, %p260
    %p262 = pneg %p261
    // Predicated region
    $region9: #{norm_dense_gcn_conv.3} parent=5 // pred_check
      _
    $region10: #{norm_dense_gcn_conv.3} parent=5 // pred_check_branch
      %264 = sbr.rel (%p261) target = $region12
    $region11: #{norm_dense_gcn_conv.3} parent=5 // pred_region
      %s265 = ssub.s32 %s13, 1
      // Predicated region
      $region13: #{norm_dense_gcn_conv.3} parent=11 // pred_check
        %p266 = pneg %p223
      $region14: #{norm_dense_gcn_conv.3} parent=11 // pred_check_branch
        %268 = sbr.rel (%p266) target = $region16
      $region15: #{norm_dense_gcn_conv.3} parent=11 // pred_region
        _
      $region16: #{norm_dense_gcn_conv.3} parent=11 // pred_fallthru
        _
    $region12: #{norm_dense_gcn_conv.3} parent=5 // pred_fallthru
      _
    %p269 = scmp.lt.s32.totalorder %s13, 2
    // Predicated region
    $region17: #{norm_dense_gcn_conv.3} parent=5 // pred_check
      %p270 = pneg %p269
    $region18: #{norm_dense_gcn_conv.3} parent=5 // pred_check_branch
      %272 = sbr.rel (%p270) target = $region20
    $region19: #{norm_dense_gcn_conv.3} parent=5 // pred_region
      // Predicated region
      $region21: #{norm_dense_gcn_conv.3} parent=19 // pred_check
        %p273 = pneg %p56
      $region22: #{norm_dense_gcn_conv.3} parent=19 // pred_check_branch
        %275 = sbr.rel (%p273) target = $region24
      $region23: #{norm_dense_gcn_conv.3} parent=19 // pred_region
        %s276 = smul.u32 16, %s21
        %p277 = scmp.lt.s32.totalorder %s20, 1
        %s278 = scalar_select %p277, %s20, 1
        %p279 = scmp.lt.s32.totalorder %s276, 15
        %s280 = scalar_select %p279, %s276, 15
        %p281 = scmp.lt.s32.totalorder %s22, 0
        %s282 = scalar_select %p281, %s22, 0
        %s283 = sadd.s32 %s282, %s280
        %s284 = smul.addr %s278, 16
        %s285 = sadd.s32 %s283, %s284
        %s286 = smul.addr %s285, 4
        %s287 = scalar_lea.vmem %s0, %s286
        %s288 = smul.u32 16, %s21
      $region24: #{norm_dense_gcn_conv.3} parent=19 // pred_fallthru
        _
      // Predicated region
      $region25: #{norm_dense_gcn_conv.3} parent=19 // pred_check
        %p289 = pneg %p84
      $region26: #{norm_dense_gcn_conv.3} parent=19 // pred_check_branch
        %291 = sbr.rel (%p289) target = $region28
      $region27: #{norm_dense_gcn_conv.3} parent=19 // pred_region
        %s292 = smul.u32 16, %s22
        %p293 = scmp.lt.s32.totalorder %s20, 1
        %s294 = scalar_select %p293, %s20, 1
        %p295 = scmp.lt.s32.totalorder %s292, 15
        %s296 = scalar_select %p295, %s292, 15
        %s297 = smul.addr %s294, 16
        %s298 = sadd.s32 %s296, %s297
        %s299 = smul.addr %s298, 4
        %s300 = scalar_lea.vmem %s1, %s299
        %s301 = smul.u32 16, %s22
      $region28: #{norm_dense_gcn_conv.3} parent=19 // pred_fallthru
        _
      // Predicated region
      $region29: #{norm_dense_gcn_conv.3} parent=19 // pred_check
        %p302 = pneg %p112
      $region30: #{norm_dense_gcn_conv.3} parent=19 // pred_check_branch
        %304 = sbr.rel (%p302) target = $region32
      $region31: #{norm_dense_gcn_conv.3} parent=19 // pred_region
        %s305 = smul.u32 16, %s22
        %p306 = scmp.lt.s32.totalorder %s20, 1
        %s307 = scalar_select %p306, %s20, 1
        %p308 = scmp.lt.s32.totalorder %s305, 15
        %s309 = scalar_select %p308, %s305, 15
        %s310 = smul.addr %s307, 16
        %s311 = sadd.s32 %s309, %s310
        %s312 = smul.addr %s311, 8
        %s313 = scalar_lea.vmem %s2, %s312
        %s314 = smul.u32 16, %s22
      $region32: #{norm_dense_gcn_conv.3} parent=19 // pred_fallthru
        _
      // Predicated region
      $region33: #{norm_dense_gcn_conv.3} parent=19 // pred_check
        %p315 = pneg %p140
      $region34: #{norm_dense_gcn_conv.3} parent=19 // pred_check_branch
        %317 = sbr.rel (%p315) target = $region36
      $region35: #{norm_dense_gcn_conv.3} parent=19 // pred_region
        %s318 = smul.u32 16, %s21
        %p319 = scmp.lt.s32.totalorder %s20, 1
        %s320 = scalar_select %p319, %s20, 1
        %p321 = scmp.lt.s32.totalorder %s318, 15
        %s322 = scalar_select %p321, %s318, 15
        %s323 = smul.addr %s320, 16
        %s324 = sadd.s32 %s322, %s323
        %s325 = smul.addr %s324, 4
        %s326 = scalar_lea.vmem %s3, %s325
        %s327 = smul.u32 16, %s21
      $region36: #{norm_dense_gcn_conv.3} parent=19 // pred_fallthru
        _
      // Predicated region
      $region37: #{norm_dense_gcn_conv.3} parent=19 // pred_check
        %p328 = pneg %p168
      $region38: #{norm_dense_gcn_conv.3} parent=19 // pred_check_branch
        %330 = sbr.rel (%p328) target = $region40
      $region39: #{norm_dense_gcn_conv.3} parent=19 // pred_region
        %s331 = smul.u32 16, %s21
        %p332 = scmp.lt.s32.totalorder %s20, 1
        %s333 = scalar_select %p332, %s20, 1
        %p334 = scmp.lt.s32.totalorder %s331, 15
        %s335 = scalar_select %p334, %s331, 15
        %s336 = smul.addr %s333, 16
        %s337 = sadd.s32 %s335, %s336
        %s338 = smul.addr %s337, 8
        %s339 = scalar_lea.vmem %s4, %s338
        %s340 = smul.u32 16, %s21
      $region40: #{norm_dense_gcn_conv.3} parent=19 // pred_fallthru
        _
      // Predicated region
      $region41: #{norm_dense_gcn_conv.3} parent=19 // pred_check
        %p341 = pneg %p196
      $region42: #{norm_dense_gcn_conv.3} parent=19 // pred_check_branch
        %343 = sbr.rel (%p341) target = $region44
      $region43: #{norm_dense_gcn_conv.3} parent=19 // pred_region
        %s344 = smul.u32 16, %s21
        %p345 = scmp.lt.s32.totalorder %s20, 1
        %s346 = scalar_select %p345, %s20, 1
        %p347 = scmp.lt.s32.totalorder %s344, 15
        %s348 = scalar_select %p347, %s344, 15
        %s349 = smul.addr %s346, 16
        %s350 = sadd.s32 %s348, %s349
        %s351 = smul.addr %s350, 8
        %s352 = scalar_lea.vmem %s5, %s351
        %s353 = smul.u32 16, %s21
      $region44: #{norm_dense_gcn_conv.3} parent=19 // pred_fallthru
        _
    $region20: #{norm_dense_gcn_conv.3} parent=5 // pred_fallthru
      _
    %p354 = scmp.le.s32.totalorder 1, %s13
    %p355 = scmp.lt.s32.totalorder %s13, 3
    %p356 = pnand %p354, %p355
    %p357 = pneg %p356
    // Predicated region
    $region45: #{norm_dense_gcn_conv.3} parent=5 // pred_check
      _
    $region46: #{norm_dense_gcn_conv.3} parent=5 // pred_check_branch
      %359 = sbr.rel (%p356) target = $region48
    $region47: #{norm_dense_gcn_conv.3} parent=5 // pred_region
      %s360 = ssub.s32 %s13, 1
      %s361 = smul.u32 16, %s24
      %p362 = scmp.lt.s32.totalorder %s23, 1
      %s363 = scalar_select %p362, %s23, 1
      %p364 = scmp.lt.s32.totalorder %s361, 15
      %s365 = scalar_select %p364, %s361, 15
      %p366 = scmp.lt.s32.totalorder %s25, 0
      %s367 = scalar_select %p366, %s25, 0
      %s368 = sadd.s32 %s367, %s365
      %s369 = smul.addr %s363, 16
      %s370 = sadd.s32 %s368, %s369
      %s371 = smul.addr %s370, 4
      %s372 = scalar_lea.vmem %s0, %s371
      %p373 = pneg %p62
      %p374 = pneg %p59
      %s375 = smul.u32 16, %s25
      %p376 = scmp.lt.s32.totalorder %s23, 1
      %s377 = scalar_select %p376, %s23, 1
      %p378 = scmp.lt.s32.totalorder %s375, 15
      %s379 = scalar_select %p378, %s375, 15
      %s380 = smul.addr %s377, 16
      %s381 = sadd.s32 %s379, %s380
      %s382 = smul.addr %s381, 4
      %s383 = scalar_lea.vmem %s1, %s382
      %p384 = pneg %p90
      %p385 = pneg %p87
      %s386 = smul.u32 16, %s25
      %p387 = scmp.lt.s32.totalorder %s23, 1
      %s388 = scalar_select %p387, %s23, 1
      %p389 = scmp.lt.s32.totalorder %s386, 15
      %s390 = scalar_select %p389, %s386, 15
      %s391 = smul.addr %s388, 16
      %s392 = sadd.s32 %s390, %s391
      %s393 = smul.addr %s392, 8
      %s394 = scalar_lea.vmem %s2, %s393
      %p395 = pneg %p118
      %p396 = pneg %p115
      %s397 = smul.u32 16, %s24
      %p398 = scmp.lt.s32.totalorder %s23, 1
      %s399 = scalar_select %p398, %s23, 1
      %p400 = scmp.lt.s32.totalorder %s397, 15
      %s401 = scalar_select %p400, %s397, 15
      %s402 = smul.addr %s399, 16
      %s403 = sadd.s32 %s401, %s402
      %s404 = smul.addr %s403, 4
      %s405 = scalar_lea.vmem %s3, %s404
      %p406 = pneg %p146
      %p407 = pneg %p143
      %s408 = smul.u32 16, %s24
      %p409 = scmp.lt.s32.totalorder %s23, 1
      %s410 = scalar_select %p409, %s23, 1
      %p411 = scmp.lt.s32.totalorder %s408, 15
      %s412 = scalar_select %p411, %s408, 15
      %s413 = smul.addr %s410, 16
      %s414 = sadd.s32 %s412, %s413
      %s415 = smul.addr %s414, 8
      %s416 = scalar_lea.vmem %s4, %s415
      %p417 = pneg %p174
      %p418 = pneg %p171
      %s419 = smul.u32 16, %s24
      %p420 = scmp.lt.s32.totalorder %s23, 1
      %s421 = scalar_select %p420, %s23, 1
      %p422 = scmp.lt.s32.totalorder %s419, 15
      %s423 = scalar_select %p422, %s419, 15
      %s424 = smul.addr %s421, 16
      %s425 = sadd.s32 %s423, %s424
      %s426 = smul.addr %s425, 8
      %s427 = scalar_lea.vmem %s5, %s426
      %p428 = pneg %p202
      %p429 = pneg %p199
      %p430 = pneg %p223
      %p431 = pneg %p220
      %p432 = pneg %p251
      %p433 = pneg %p248
      %s434 = smul.u32 16, %s24
      %p435 = scmp.lt.s32.totalorder %s23, 1
      %s436 = scalar_select %p435, %s23, 1
      %p437 = scmp.lt.s32.totalorder %s434, 15
      %s438 = scalar_select %p437, %s434, 15
      %s439 = smul.addr %s436, 16
      %s440 = sadd.s32 %s438, %s439
      %s441 = smul.addr %s440, 8
      %s442 = scalar_lea.vmem %s7, %s441
      %s443 = smul.u32 16, %s24
      %p444 = scmp.lt.s32.totalorder %s23, 1
      %s445 = scalar_select %p444, %s23, 1
      %p446 = scmp.lt.s32.totalorder %s443, 15
      %s447 = scalar_select %p446, %s443, 15
      %p448 = scmp.lt.s32.totalorder %s25, 0
      %s449 = scalar_select %p448, %s25, 0
      %s450 = sadd.s32 %s449, %s447
      %s451 = smul.addr %s445, 16
      %s452 = sadd.s32 %s450, %s451
      %s453 = smul.addr %s452, 4
      %s454 = scalar_lea.vmem %s0, %s453
      %s455 = smul.u32 16, %s24
      %s456 = smul.u32 16, %s25
      %p457 = scmp.lt.s32.totalorder %s23, 1
      %s458 = scalar_select %p457, %s23, 1
      %p459 = scmp.lt.s32.totalorder %s456, 15
      %s460 = scalar_select %p459, %s456, 15
      %s461 = smul.addr %s458, 16
      %s462 = sadd.s32 %s460, %s461
      %s463 = smul.addr %s462, 4
      %s464 = scalar_lea.vmem %s1, %s463
      %s465 = smul.u32 16, %s25
      %s466 = smul.u32 16, %s25
      %p467 = scmp.lt.s32.totalorder %s23, 1
      %s468 = scalar_select %p467, %s23, 1
      %p469 = scmp.lt.s32.totalorder %s466, 15
      %s470 = scalar_select %p469, %s466, 15
      %s471 = smul.addr %s468, 16
      %s472 = sadd.s32 %s470, %s471
      %s473 = smul.addr %s472, 8
      %s474 = scalar_lea.vmem %s2, %s473
      %s475 = smul.u32 16, %s25
      %s476 = smul.u32 16, %s24
      %p477 = scmp.lt.s32.totalorder %s23, 1
      %s478 = scalar_select %p477, %s23, 1
      %p479 = scmp.lt.s32.totalorder %s476, 15
      %s480 = scalar_select %p479, %s476, 15
      %s481 = smul.addr %s478, 16
      %s482 = sadd.s32 %s480, %s481
      %s483 = smul.addr %s482, 4
      %s484 = scalar_lea.vmem %s3, %s483
      %s485 = smul.u32 16, %s24
      %s486 = smul.u32 16, %s24
      %p487 = scmp.lt.s32.totalorder %s23, 1
      %s488 = scalar_select %p487, %s23, 1
      %p489 = scmp.lt.s32.totalorder %s486, 15
      %s490 = scalar_select %p489, %s486, 15
      %s491 = smul.addr %s488, 16
      %s492 = sadd.s32 %s490, %s491
      %s493 = smul.addr %s492, 8
      %s494 = scalar_lea.vmem %s4, %s493
      %s495 = smul.u32 16, %s24
      %s496 = smul.u32 16, %s24
      %p497 = scmp.lt.s32.totalorder %s23, 1
      %s498 = scalar_select %p497, %s23, 1
      %p499 = scmp.lt.s32.totalorder %s496, 15
      %s500 = scalar_select %p499, %s496, 15
      %s501 = smul.addr %s498, 16
      %s502 = sadd.s32 %s500, %s501
      %s503 = smul.addr %s502, 8
      %s504 = scalar_lea.vmem %s5, %s503
      %s505 = smul.u32 16, %s24
      %s506 = smul.u32 16, %s24
      %p507 = scmp.lt.s32.totalorder %s23, 1
      %s508 = scalar_select %p507, %s23, 1
      %p509 = scmp.lt.s32.totalorder %s506, 15
      %s510 = scalar_select %p509, %s506, 15
      %s511 = smul.addr %s508, 16
      %s512 = sadd.s32 %s510, %s511
      %s513 = smul.addr %s512, 8
      %s514 = scalar_lea.vmem %s7, %s513
      %s515 = smul.u32 16, %s24
      %p517 = scmp.eq.s32.totalorder %s25, 0
      // Predicated region
      $region49: #{norm_dense_gcn_conv.3} parent=47 // pred_check
        %p518 = pneg %p517
      $region50: #{norm_dense_gcn_conv.3} parent=47 // pred_check_branch
        %520 = sbr.rel (%p518) target = $region52
      $region51: #{norm_dense_gcn_conv.3} parent=47 // pred_region
        %521 = vst [vmem:[%s514] sm:$0xff] 0.0
        %522 = vst [vmem:[%s514 + $0x8] sm:$0xff] 0.0
        %523 = vst [vmem:[%s514 + $0x10] sm:$0xff] 0.0
        %524 = vst [vmem:[%s514 + $0x18] sm:$0xff] 0.0
        %525 = vst [vmem:[%s514 + $0x20] sm:$0xff] 0.0
        %526 = vst [vmem:[%s514 + $0x28] sm:$0xff] 0.0
        %527 = vst [vmem:[%s514 + $0x30] sm:$0xff] 0.0
        %528 = vst [vmem:[%s514 + $0x38] sm:$0xff] 0.0
        %529 = vst [vmem:[%s514 + $0x40] sm:$0xff] 0.0
        %530 = vst [vmem:[%s514 + $0x48] sm:$0xff] 0.0
        %531 = vst [vmem:[%s514 + $0x50] sm:$0xff] 0.0
        %532 = vst [vmem:[%s514 + $0x58] sm:$0xff] 0.0
        %533 = vst [vmem:[%s514 + $0x60] sm:$0xff] 0.0
        %534 = vst [vmem:[%s514 + $0x68] sm:$0xff] 0.0
        %535 = vst [vmem:[%s514 + $0x70] sm:$0xff] 0.0
        %536 = vst [vmem:[%s514 + $0x78] sm:$0xff] 0.0
      $region52: #{norm_dense_gcn_conv.3} parent=47 // pred_fallthru
        _
      %v537 = vld [vmem:[%s474] sm:$0xff]
      %v538 = vld [vmem:[%s474 + $0x8] sm:$0xff]
      %v539 = vld [vmem:[%s474 + $0x10] sm:$0xff]
      %v540 = vld [vmem:[%s474 + $0x18] sm:$0xff]
      %v541 = vld [vmem:[%s474 + $0x20] sm:$0xff]
      %v542 = vld [vmem:[%s474 + $0x28] sm:$0xff]
      %v543 = vld [vmem:[%s474 + $0x30] sm:$0xff]
      %v544 = vld [vmem:[%s474 + $0x38] sm:$0xff]
      %v545 = vld [vmem:[%s474 + $0x40] sm:$0xff]
      %v546 = vld [vmem:[%s474 + $0x48] sm:$0xff]
      %v547 = vld [vmem:[%s474 + $0x50] sm:$0xff]
      %v548 = vld [vmem:[%s474 + $0x58] sm:$0xff]
      %v549 = vld [vmem:[%s474 + $0x60] sm:$0xff]
      %v550 = vld [vmem:[%s474 + $0x68] sm:$0xff]
      %v551 = vld [vmem:[%s474 + $0x70] sm:$0xff]
      %v552 = vld [vmem:[%s474 + $0x78] sm:$0xff]
      %v553 = vld [vmem:[%s464] sm:$0xf]
      %v554 = vld [vmem:[%s464 + $0x4] sm:$0xf]
      %v555 = vld [vmem:[%s464 + $0x8] sm:$0xf]
      %v556 = vld [vmem:[%s464 + $0xc] sm:$0xf]
      %v557 = vld [vmem:[%s464 + $0x10] sm:$0xf]
      %v558 = vld [vmem:[%s464 + $0x14] sm:$0xf]
      %v559 = vld [vmem:[%s464 + $0x18] sm:$0xf]
      %v560 = vld [vmem:[%s464 + $0x1c] sm:$0xf]
      %v561 = vld [vmem:[%s464 + $0x20] sm:$0xf]
      %v562 = vld [vmem:[%s464 + $0x24] sm:$0xf]
      %v563 = vld [vmem:[%s464 + $0x28] sm:$0xf]
      %v564 = vld [vmem:[%s464 + $0x2c] sm:$0xf]
      %v565 = vld [vmem:[%s464 + $0x30] sm:$0xf]
      %v566 = vld [vmem:[%s464 + $0x34] sm:$0xf]
      %v567 = vld [vmem:[%s464 + $0x38] sm:$0xf]
      %v568 = vld [vmem:[%s464 + $0x3c] sm:$0xf]
      %v569 = vunpack.c.l.bf16 %v553
      %v570 = vunpack.c.l.bf16 %v554
      %v571 = vunpack.c.l.bf16 %v555
      %v572 = vunpack.c.l.bf16 %v556
      %v573 = vunpack.c.l.bf16 %v557
      %v574 = vunpack.c.l.bf16 %v558
      %v575 = vunpack.c.l.bf16 %v559
      %v576 = vunpack.c.l.bf16 %v560
      %v577 = vunpack.c.l.bf16 %v561
      %v578 = vunpack.c.l.bf16 %v562
      %v579 = vunpack.c.l.bf16 %v563
      %v580 = vunpack.c.l.bf16 %v564
      %v581 = vunpack.c.l.bf16 %v565
      %v582 = vunpack.c.l.bf16 %v566
      %v583 = vunpack.c.l.bf16 %v567
      %v584 = vunpack.c.l.bf16 %v568
      %586 = vset.pattern.permute.xlu0 0
      %587 = vperm.xlu0 %586, %v537
      %v588 = vpop.permute.xlu0 %587
      %591 = vset.pattern.permute.xlu0 0
      %592 = vperm.xlu0 %591, %v538
      %v593 = vpop.permute.xlu0 %592
      %596 = vset.pattern.permute.xlu0 0
      %597 = vperm.xlu0 %596, %v539
      %v598 = vpop.permute.xlu0 %597
      %601 = vset.pattern.permute.xlu0 0
      %602 = vperm.xlu0 %601, %v540
      %v603 = vpop.permute.xlu0 %602
      %606 = vset.pattern.permute.xlu0 0
      %607 = vperm.xlu0 %606, %v541
      %v608 = vpop.permute.xlu0 %607
      %611 = vset.pattern.permute.xlu0 0
      %612 = vperm.xlu0 %611, %v542
      %v613 = vpop.permute.xlu0 %612
      %616 = vset.pattern.permute.xlu0 0
      %617 = vperm.xlu0 %616, %v543
      %v618 = vpop.permute.xlu0 %617
      %621 = vset.pattern.permute.xlu0 0
      %622 = vperm.xlu0 %621, %v544
      %v623 = vpop.permute.xlu0 %622
      %626 = vset.pattern.permute.xlu0 0
      %627 = vperm.xlu0 %626, %v545
      %v628 = vpop.permute.xlu0 %627
      %631 = vset.pattern.permute.xlu0 0
      %632 = vperm.xlu0 %631, %v546
      %v633 = vpop.permute.xlu0 %632
      %636 = vset.pattern.permute.xlu0 0
      %637 = vperm.xlu0 %636, %v547
      %v638 = vpop.permute.xlu0 %637
      %641 = vset.pattern.permute.xlu0 0
      %642 = vperm.xlu0 %641, %v548
      %v643 = vpop.permute.xlu0 %642
      %646 = vset.pattern.permute.xlu0 0
      %647 = vperm.xlu0 %646, %v549
      %v648 = vpop.permute.xlu0 %647
      %651 = vset.pattern.permute.xlu0 0
      %652 = vperm.xlu0 %651, %v550
      %v653 = vpop.permute.xlu0 %652
      %656 = vset.pattern.permute.xlu0 0
      %657 = vperm.xlu0 %656, %v551
      %v658 = vpop.permute.xlu0 %657
      %661 = vset.pattern.permute.xlu0 0
      %662 = vperm.xlu0 %661, %v552
      %v663 = vpop.permute.xlu0 %662
      %v665 = vmul.f32 %v588, %v569
      %v666 = vmul.f32 %v593, %v570
      %v667 = vmul.f32 %v598, %v571
      %v668 = vmul.f32 %v603, %v572
      %v669 = vmul.f32 %v608, %v573
      %v670 = vmul.f32 %v613, %v574
      %v671 = vmul.f32 %v618, %v575
      %v672 = vmul.f32 %v623, %v576
      %v673 = vmul.f32 %v628, %v577
      %v674 = vmul.f32 %v633, %v578
      %v675 = vmul.f32 %v638, %v579
      %v676 = vmul.f32 %v643, %v580
      %v677 = vmul.f32 %v648, %v581
      %v678 = vmul.f32 %v653, %v582
      %v679 = vmul.f32 %v658, %v583
      %v680 = vmul.f32 %v663, %v584
      %v681 = vpack.c.bf16 %v666, %v665
      %v682 = vpack.c.bf16 %v668, %v667
      %v683 = vpack.c.bf16 %v670, %v669
      %v684 = vpack.c.bf16 %v672, %v671
      %v685 = vpack.c.bf16 %v674, %v673
      %v686 = vpack.c.bf16 %v676, %v675
      %v687 = vpack.c.bf16 %v678, %v677
      %v688 = vpack.c.bf16 %v680, %v679
      %v689 = vld [vmem:[%s514] sm:$0xff]
      %v690 = vld [vmem:[%s514 + $0x8] sm:$0xff]
      %v691 = vld [vmem:[%s514 + $0x10] sm:$0xff]
      %v692 = vld [vmem:[%s514 + $0x18] sm:$0xff]
      %v693 = vld [vmem:[%s514 + $0x20] sm:$0xff]
      %v694 = vld [vmem:[%s514 + $0x28] sm:$0xff]
      %v695 = vld [vmem:[%s514 + $0x30] sm:$0xff]
      %v696 = vld [vmem:[%s514 + $0x38] sm:$0xff]
      %v697 = vld [vmem:[%s514 + $0x40] sm:$0xff]
      %v698 = vld [vmem:[%s514 + $0x48] sm:$0xff]
      %v699 = vld [vmem:[%s514 + $0x50] sm:$0xff]
      %v700 = vld [vmem:[%s514 + $0x58] sm:$0xff]
      %v701 = vld [vmem:[%s514 + $0x60] sm:$0xff]
      %v702 = vld [vmem:[%s514 + $0x68] sm:$0xff]
      %v703 = vld [vmem:[%s514 + $0x70] sm:$0xff]
      %v704 = vld [vmem:[%s514 + $0x78] sm:$0xff]
      %v705 = vld [vmem:[%s454] sm:$0xf]
      %v706 = vld [vmem:[%s454 + $0x4] sm:$0xf]
      %v707 = vld [vmem:[%s454 + $0x8] sm:$0xf]
      %v708 = vld [vmem:[%s454 + $0xc] sm:$0xf]
      %v709 = vld [vmem:[%s454 + $0x10] sm:$0xf]
      %v710 = vld [vmem:[%s454 + $0x14] sm:$0xf]
      %v711 = vld [vmem:[%s454 + $0x18] sm:$0xf]
      %v712 = vld [vmem:[%s454 + $0x1c] sm:$0xf]
      %v713 = vld [vmem:[%s454 + $0x20] sm:$0xf]
      %v714 = vld [vmem:[%s454 + $0x24] sm:$0xf]
      %v715 = vld [vmem:[%s454 + $0x28] sm:$0xf]
      %v716 = vld [vmem:[%s454 + $0x2c] sm:$0xf]
      %v717 = vld [vmem:[%s454 + $0x30] sm:$0xf]
      %v718 = vld [vmem:[%s454 + $0x34] sm:$0xf]
      %v719 = vld [vmem:[%s454 + $0x38] sm:$0xf]
      %v720 = vld [vmem:[%s454 + $0x3c] sm:$0xf]
      %v737 = vunpack.c.l.b16 %v705
      %v738 = vunpack.c.l.b16 %v706
      %v739 = vunpack.c.l.b16 %v707
      %v740 = vunpack.c.l.b16 %v708
      %v741 = vunpack.c.l.b16 %v709
      %v742 = vunpack.c.l.b16 %v710
      %v743 = vunpack.c.l.b16 %v711
      %v744 = vunpack.c.l.b16 %v712
      %v745 = vunpack.c.l.b16 %v713
      %v746 = vunpack.c.l.b16 %v714
      %v747 = vunpack.c.l.b16 %v715
      %v748 = vunpack.c.l.b16 %v716
      %v749 = vunpack.c.l.b16 %v717
      %v750 = vunpack.c.l.b16 %v718
      %v751 = vunpack.c.l.b16 %v719
      %v752 = vunpack.c.l.b16 %v720
      %v753 = vpack.c.b16 %v738, %v737
      %v754 = vpack.c.b16 %v740, %v739
      %v755 = vpack.c.b16 %v742, %v741
      %v756 = vpack.c.b16 %v744, %v743
      %v757 = vpack.c.b16 %v746, %v745
      %v758 = vpack.c.b16 %v748, %v747
      %v759 = vpack.c.b16 %v750, %v749
      %v760 = vpack.c.b16 %v752, %v751
      %769 = vmatprep.subr.bf16.mxu0 0
      %770 = vmatpush1.bf16.msra.mxu0 %v688
      %771 = vmatprep.subr.bf16.mxu0 0
      %772 = vmatpush1.bf16.msra.mxu0 %v687
      %773 = vmatprep.subr.bf16.mxu0 0
      %774 = vmatpush1.bf16.msra.mxu0 %v686
      %775 = vmatprep.subr.bf16.mxu0 0
      %776 = vmatpush1.bf16.msra.mxu0 %v685
      %777 = vmatprep.subr.bf16.mxu0 0
      %778 = vmatpush1.bf16.msra.mxu0 %v684
      %779 = vmatprep.subr.bf16.mxu0 0
      %780 = vmatpush1.bf16.msra.mxu0 %v683
      %781 = vmatprep.subr.bf16.mxu0 0
      %782 = vmatpush1.bf16.msra.mxu0 %v682
      %783 = vmatprep.subr.bf16.mxu0 0
      %784 = vmatpush1.bf16.msra.mxu0 %v681
      %785 = vmatprep.subr.bf16.mxu0 0
      %786 = vmatpush2.bf16.msra.mxu0 0
      %787 = vmatprep.subr.bf16.mxu0 0
      %788 = vmatpush2.bf16.msra.mxu0 0
      %789 = vmatprep.subr.bf16.mxu0 0
      %790 = vmatpush2.bf16.msra.mxu0 0
      %791 = vmatprep.subr.bf16.mxu0 0
      %792 = vmatpush2.bf16.msra.mxu0 0
      %793 = vmatprep.subr.bf16.mxu0 0
      %794 = vmatpush2.bf16.msra.mxu0 0
      %795 = vmatprep.subr.bf16.mxu0 0
      %796 = vmatpush2.bf16.msra.mxu0 0
      %797 = vmatprep.subr.bf16.mxu0 0
      %798 = vmatpush2.bf16.msra.mxu0 0
      %799 = vmatprep.subr.bf16.mxu0 0
      %800 = vmatpush2.bf16.msra.mxu0 0
      %801 = vmatprep.mubr.bf16.mxu0 0
      %802 = vmatmul.mubr.bf16.gmra.mxu0 %v753
      %v803 = vpop.f32.mrf.mxu0
      %v804 = vadd.f32 0.0, %v803
      %v805 = vpop.f32.mrf.mxu0
      %v806 = vpop.f32.mrf.mxu0
      %v807 = vadd.f32 0.0, %v806
      %v808 = vpop.f32.mrf.mxu0
      %809 = vmatprep.mubr.bf16.mxu0 0
      %810 = vmatmul.mubr.bf16.gmra.mxu0 %v754
      %v811 = vpop.f32.mrf.mxu0
      %v812 = vadd.f32 0.0, %v811
      %v813 = vpop.f32.mrf.mxu0
      %v814 = vpop.f32.mrf.mxu0
      %v815 = vadd.f32 0.0, %v814
      %v816 = vpop.f32.mrf.mxu0
      %817 = vmatprep.mubr.bf16.mxu0 0
      %818 = vmatmul.mubr.bf16.gmra.mxu0 %v755
      %v819 = vpop.f32.mrf.mxu0
      %v820 = vadd.f32 0.0, %v819
      %v821 = vpop.f32.mrf.mxu0
      %v822 = vpop.f32.mrf.mxu0
      %v823 = vadd.f32 0.0, %v822
      %v824 = vpop.f32.mrf.mxu0
      %825 = vmatprep.mubr.bf16.mxu0 0
      %826 = vmatmul.mubr.bf16.gmra.mxu0 %v756
      %v827 = vpop.f32.mrf.mxu0
      %v828 = vadd.f32 0.0, %v827
      %v829 = vpop.f32.mrf.mxu0
      %v830 = vpop.f32.mrf.mxu0
      %v831 = vadd.f32 0.0, %v830
      %v832 = vpop.f32.mrf.mxu0
      %833 = vmatprep.mubr.bf16.mxu0 0
      %834 = vmatmul.mubr.bf16.gmra.mxu0 %v757
      %v835 = vpop.f32.mrf.mxu0
      %v836 = vadd.f32 0.0, %v835
      %v837 = vpop.f32.mrf.mxu0
      %v838 = vpop.f32.mrf.mxu0
      %v839 = vadd.f32 0.0, %v838
      %v840 = vpop.f32.mrf.mxu0
      %841 = vmatprep.mubr.bf16.mxu0 0
      %842 = vmatmul.mubr.bf16.gmra.mxu0 %v758
      %v843 = vpop.f32.mrf.mxu0
      %v844 = vadd.f32 0.0, %v843
      %v845 = vpop.f32.mrf.mxu0
      %v846 = vpop.f32.mrf.mxu0
      %v847 = vadd.f32 0.0, %v846
      %v848 = vpop.f32.mrf.mxu0
      %849 = vmatprep.mubr.bf16.mxu0 0
      %850 = vmatmul.mubr.bf16.gmra.mxu0 %v759
      %v851 = vpop.f32.mrf.mxu0
      %v852 = vadd.f32 0.0, %v851
      %v853 = vpop.f32.mrf.mxu0
      %v854 = vpop.f32.mrf.mxu0
      %v855 = vadd.f32 0.0, %v854
      %v856 = vpop.f32.mrf.mxu0
      %857 = vmatprep.mubr.bf16.mxu0 0
      %858 = vmatmul.mubr.bf16.gmra.mxu0 %v760
      %v859 = vpop.f32.mrf.mxu0
      %v860 = vadd.f32 0.0, %v859
      %v861 = vpop.f32.mrf.mxu0
      %v862 = vpop.f32.mrf.mxu0
      %v863 = vadd.f32 0.0, %v862
      %v864 = vpop.f32.mrf.mxu0
      %865 = vdwg.mxu0
      %v866 = vadd.f32 %v689, %v804
      %v867 = vadd.f32 %v690, %v807
      %v868 = vadd.f32 %v691, %v812
      %v869 = vadd.f32 %v692, %v815
      %v870 = vadd.f32 %v693, %v820
      %v871 = vadd.f32 %v694, %v823
      %v872 = vadd.f32 %v695, %v828
      %v873 = vadd.f32 %v696, %v831
      %v874 = vadd.f32 %v697, %v836
      %v875 = vadd.f32 %v698, %v839
      %v876 = vadd.f32 %v699, %v844
      %v877 = vadd.f32 %v700, %v847
      %v878 = vadd.f32 %v701, %v852
      %v879 = vadd.f32 %v702, %v855
      %v880 = vadd.f32 %v703, %v860
      %v881 = vadd.f32 %v704, %v863
      %882 = vst [vmem:[%s514] sm:$0xff] %v866
      %883 = vst [vmem:[%s514 + $0x8] sm:$0xff] %v867
      %884 = vst [vmem:[%s514 + $0x10] sm:$0xff] %v868
      %885 = vst [vmem:[%s514 + $0x18] sm:$0xff] %v869
      %886 = vst [vmem:[%s514 + $0x20] sm:$0xff] %v870
      %887 = vst [vmem:[%s514 + $0x28] sm:$0xff] %v871
      %888 = vst [vmem:[%s514 + $0x30] sm:$0xff] %v872
      %889 = vst [vmem:[%s514 + $0x38] sm:$0xff] %v873
      %890 = vst [vmem:[%s514 + $0x40] sm:$0xff] %v874
      %891 = vst [vmem:[%s514 + $0x48] sm:$0xff] %v875
      %892 = vst [vmem:[%s514 + $0x50] sm:$0xff] %v876
      %893 = vst [vmem:[%s514 + $0x58] sm:$0xff] %v877
      %894 = vst [vmem:[%s514 + $0x60] sm:$0xff] %v878
      %895 = vst [vmem:[%s514 + $0x68] sm:$0xff] %v879
      %896 = vst [vmem:[%s514 + $0x70] sm:$0xff] %v880
      %897 = vst [vmem:[%s514 + $0x78] sm:$0xff] %v881
      // Predicated region
      $region53: #{norm_dense_gcn_conv.3} parent=47 // pred_check
        %p898 = pneg %p517
      $region54: #{norm_dense_gcn_conv.3} parent=47 // pred_check_branch
        %900 = sbr.rel (%p898) target = $region56
      $region55: #{norm_dense_gcn_conv.3} parent=47 // pred_region
        %v901 = vld [vmem:[%s504] sm:$0xff]
        %v902 = vld [vmem:[%s504 + $0x8] sm:$0xff]
        %v903 = vld [vmem:[%s504 + $0x10] sm:$0xff]
        %v904 = vld [vmem:[%s504 + $0x18] sm:$0xff]
        %v905 = vld [vmem:[%s504 + $0x20] sm:$0xff]
        %v906 = vld [vmem:[%s504 + $0x28] sm:$0xff]
        %v907 = vld [vmem:[%s504 + $0x30] sm:$0xff]
        %v908 = vld [vmem:[%s504 + $0x38] sm:$0xff]
        %v909 = vld [vmem:[%s504 + $0x40] sm:$0xff]
        %v910 = vld [vmem:[%s504 + $0x48] sm:$0xff]
        %v911 = vld [vmem:[%s504 + $0x50] sm:$0xff]
        %v912 = vld [vmem:[%s504 + $0x58] sm:$0xff]
        %v913 = vld [vmem:[%s504 + $0x60] sm:$0xff]
        %v914 = vld [vmem:[%s504 + $0x68] sm:$0xff]
        %v915 = vld [vmem:[%s504 + $0x70] sm:$0xff]
        %v916 = vld [vmem:[%s504 + $0x78] sm:$0xff]
        %v917 = vld [vmem:[%s494] sm:$0xff]
        %v918 = vld [vmem:[%s494 + $0x8] sm:$0xff]
        %v919 = vld [vmem:[%s494 + $0x10] sm:$0xff]
        %v920 = vld [vmem:[%s494 + $0x18] sm:$0xff]
        %v921 = vld [vmem:[%s494 + $0x20] sm:$0xff]
        %v922 = vld [vmem:[%s494 + $0x28] sm:$0xff]
        %v923 = vld [vmem:[%s494 + $0x30] sm:$0xff]
        %v924 = vld [vmem:[%s494 + $0x38] sm:$0xff]
        %v925 = vld [vmem:[%s494 + $0x40] sm:$0xff]
        %v926 = vld [vmem:[%s494 + $0x48] sm:$0xff]
        %v927 = vld [vmem:[%s494 + $0x50] sm:$0xff]
        %v928 = vld [vmem:[%s494 + $0x58] sm:$0xff]
        %v929 = vld [vmem:[%s494 + $0x60] sm:$0xff]
        %v930 = vld [vmem:[%s494 + $0x68] sm:$0xff]
        %v931 = vld [vmem:[%s494 + $0x70] sm:$0xff]
        %v932 = vld [vmem:[%s494 + $0x78] sm:$0xff]
        %v933 = vld [vmem:[%s514] sm:$0xff]
        %v934 = vld [vmem:[%s514 + $0x8] sm:$0xff]
        %v935 = vld [vmem:[%s514 + $0x10] sm:$0xff]
        %v936 = vld [vmem:[%s514 + $0x18] sm:$0xff]
        %v937 = vld [vmem:[%s514 + $0x20] sm:$0xff]
        %v938 = vld [vmem:[%s514 + $0x28] sm:$0xff]
        %v939 = vld [vmem:[%s514 + $0x30] sm:$0xff]
        %v940 = vld [vmem:[%s514 + $0x38] sm:$0xff]
        %v941 = vld [vmem:[%s514 + $0x40] sm:$0xff]
        %v942 = vld [vmem:[%s514 + $0x48] sm:$0xff]
        %v943 = vld [vmem:[%s514 + $0x50] sm:$0xff]
        %v944 = vld [vmem:[%s514 + $0x58] sm:$0xff]
        %v945 = vld [vmem:[%s514 + $0x60] sm:$0xff]
        %v946 = vld [vmem:[%s514 + $0x68] sm:$0xff]
        %v947 = vld [vmem:[%s514 + $0x70] sm:$0xff]
        %v948 = vld [vmem:[%s514 + $0x78] sm:$0xff]
        %950 = vset.pattern.permute.xlu0 0
        %951 = vperm.xlu0 %950, %v917
        %v952 = vpop.permute.xlu0 %951
        %955 = vset.pattern.permute.xlu0 0
        %956 = vperm.xlu0 %955, %v918
        %v957 = vpop.permute.xlu0 %956
        %960 = vset.pattern.permute.xlu0 0
        %961 = vperm.xlu0 %960, %v919
        %v962 = vpop.permute.xlu0 %961
        %965 = vset.pattern.permute.xlu0 0
        %966 = vperm.xlu0 %965, %v920
        %v967 = vpop.permute.xlu0 %966
        %970 = vset.pattern.permute.xlu0 0
        %971 = vperm.xlu0 %970, %v921
        %v972 = vpop.permute.xlu0 %971
        %975 = vset.pattern.permute.xlu0 0
        %976 = vperm.xlu0 %975, %v922
        %v977 = vpop.permute.xlu0 %976
        %980 = vset.pattern.permute.xlu0 0
        %981 = vperm.xlu0 %980, %v923
        %v982 = vpop.permute.xlu0 %981
        %985 = vset.pattern.permute.xlu0 0
        %986 = vperm.xlu0 %985, %v924
        %v987 = vpop.permute.xlu0 %986
        %990 = vset.pattern.permute.xlu0 0
        %991 = vperm.xlu0 %990, %v925
        %v992 = vpop.permute.xlu0 %991
        %995 = vset.pattern.permute.xlu0 0
        %996 = vperm.xlu0 %995, %v926
        %v997 = vpop.permute.xlu0 %996
        %1000 = vset.pattern.permute.xlu0 0
        %1001 = vperm.xlu0 %1000, %v927
        %v1002 = vpop.permute.xlu0 %1001
        %1005 = vset.pattern.permute.xlu0 0
        %1006 = vperm.xlu0 %1005, %v928
        %v1007 = vpop.permute.xlu0 %1006
        %1010 = vset.pattern.permute.xlu0 0
        %1011 = vperm.xlu0 %1010, %v929
        %v1012 = vpop.permute.xlu0 %1011
        %1015 = vset.pattern.permute.xlu0 0
        %1016 = vperm.xlu0 %1015, %v930
        %v1017 = vpop.permute.xlu0 %1016
        %1020 = vset.pattern.permute.xlu0 0
        %1021 = vperm.xlu0 %1020, %v931
        %v1022 = vpop.permute.xlu0 %1021
        %1025 = vset.pattern.permute.xlu0 0
        %1026 = vperm.xlu0 %1025, %v932
        %v1027 = vpop.permute.xlu0 %1026
        %v1029 = vmul.f32 %v952, %v933
        %v1030 = vmul.f32 %v957, %v934
        %v1031 = vmul.f32 %v962, %v935
        %v1032 = vmul.f32 %v967, %v936
        %v1033 = vmul.f32 %v972, %v937
        %v1034 = vmul.f32 %v977, %v938
        %v1035 = vmul.f32 %v982, %v939
        %v1036 = vmul.f32 %v987, %v940
        %v1037 = vmul.f32 %v992, %v941
        %v1038 = vmul.f32 %v997, %v942
        %v1039 = vmul.f32 %v1002, %v943
        %v1040 = vmul.f32 %v1007, %v944
        %v1041 = vmul.f32 %v1012, %v945
        %v1042 = vmul.f32 %v1017, %v946
        %v1043 = vmul.f32 %v1022, %v947
        %v1044 = vmul.f32 %v1027, %v948
        %v1045 = vld [vmem:[%s484] sm:$0xf]
        %v1046 = vld [vmem:[%s484 + $0x4] sm:$0xf]
        %v1047 = vld [vmem:[%s484 + $0x8] sm:$0xf]
        %v1048 = vld [vmem:[%s484 + $0xc] sm:$0xf]
        %v1049 = vld [vmem:[%s484 + $0x10] sm:$0xf]
        %v1050 = vld [vmem:[%s484 + $0x14] sm:$0xf]
        %v1051 = vld [vmem:[%s484 + $0x18] sm:$0xf]
        %v1052 = vld [vmem:[%s484 + $0x1c] sm:$0xf]
        %v1053 = vld [vmem:[%s484 + $0x20] sm:$0xf]
        %v1054 = vld [vmem:[%s484 + $0x24] sm:$0xf]
        %v1055 = vld [vmem:[%s484 + $0x28] sm:$0xf]
        %v1056 = vld [vmem:[%s484 + $0x2c] sm:$0xf]
        %v1057 = vld [vmem:[%s484 + $0x30] sm:$0xf]
        %v1058 = vld [vmem:[%s484 + $0x34] sm:$0xf]
        %v1059 = vld [vmem:[%s484 + $0x38] sm:$0xf]
        %v1060 = vld [vmem:[%s484 + $0x3c] sm:$0xf]
        %v1061 = vunpack.c.l.bf16 %v1045
        %v1062 = vunpack.c.l.bf16 %v1046
        %v1063 = vunpack.c.l.bf16 %v1047
        %v1064 = vunpack.c.l.bf16 %v1048
        %v1065 = vunpack.c.l.bf16 %v1049
        %v1066 = vunpack.c.l.bf16 %v1050
        %v1067 = vunpack.c.l.bf16 %v1051
        %v1068 = vunpack.c.l.bf16 %v1052
        %v1069 = vunpack.c.l.bf16 %v1053
        %v1070 = vunpack.c.l.bf16 %v1054
        %v1071 = vunpack.c.l.bf16 %v1055
        %v1072 = vunpack.c.l.bf16 %v1056
        %v1073 = vunpack.c.l.bf16 %v1057
        %v1074 = vunpack.c.l.bf16 %v1058
        %v1075 = vunpack.c.l.bf16 %v1059
        %v1076 = vunpack.c.l.bf16 %v1060
        %v1077 = vadd.f32 %v1029, %v1061
        %v1078 = vadd.f32 %v1030, %v1062
        %v1079 = vadd.f32 %v1031, %v1063
        %v1080 = vadd.f32 %v1032, %v1064
        %v1081 = vadd.f32 %v1033, %v1065
        %v1082 = vadd.f32 %v1034, %v1066
        %v1083 = vadd.f32 %v1035, %v1067
        %v1084 = vadd.f32 %v1036, %v1068
        %v1085 = vadd.f32 %v1037, %v1069
        %v1086 = vadd.f32 %v1038, %v1070
        %v1087 = vadd.f32 %v1039, %v1071
        %v1088 = vadd.f32 %v1040, %v1072
        %v1089 = vadd.f32 %v1041, %v1073
        %v1090 = vadd.f32 %v1042, %v1074
        %v1091 = vadd.f32 %v1043, %v1075
        %v1092 = vadd.f32 %v1044, %v1076
        %v1093 = vld [vmem:[%s6] sm:$0x1]
        %v1095 = vlaneseq
        %v1096 = vshrl.u32 %v1095, 7
        %v1097 = vsub.s32 0, %v1096
        %v1098 = vrot.slane %v1093, %v1097
        %v1100 = vadd.f32 %v1077, %v1098
        %v1101 = vadd.f32 %v1078, %v1098
        %v1102 = vadd.f32 %v1079, %v1098
        %v1103 = vadd.f32 %v1080, %v1098
        %v1104 = vadd.f32 %v1081, %v1098
        %v1105 = vadd.f32 %v1082, %v1098
        %v1106 = vadd.f32 %v1083, %v1098
        %v1107 = vadd.f32 %v1084, %v1098
        %v1108 = vadd.f32 %v1085, %v1098
        %v1109 = vadd.f32 %v1086, %v1098
        %v1110 = vadd.f32 %v1087, %v1098
        %v1111 = vadd.f32 %v1088, %v1098
        %v1112 = vadd.f32 %v1089, %v1098
        %v1113 = vadd.f32 %v1090, %v1098
        %v1114 = vadd.f32 %v1091, %v1098
        %v1115 = vadd.f32 %v1092, %v1098
        %1117 = vset.pattern.permute.xlu0 0
        %1118 = vperm.xlu0 %1117, %v901
        %v1119 = vpop.permute.xlu0 %1118
        %1122 = vset.pattern.permute.xlu0 0
        %1123 = vperm.xlu0 %1122, %v902
        %v1124 = vpop.permute.xlu0 %1123
        %1127 = vset.pattern.permute.xlu0 0
        %1128 = vperm.xlu0 %1127, %v903
        %v1129 = vpop.permute.xlu0 %1128
        %1132 = vset.pattern.permute.xlu0 0
        %1133 = vperm.xlu0 %1132, %v904
        %v1134 = vpop.permute.xlu0 %1133
        %1137 = vset.pattern.permute.xlu0 0
        %1138 = vperm.xlu0 %1137, %v905
        %v1139 = vpop.permute.xlu0 %1138
        %1142 = vset.pattern.permute.xlu0 0
        %1143 = vperm.xlu0 %1142, %v906
        %v1144 = vpop.permute.xlu0 %1143
        %1147 = vset.pattern.permute.xlu0 0
        %1148 = vperm.xlu0 %1147, %v907
        %v1149 = vpop.permute.xlu0 %1148
        %1152 = vset.pattern.permute.xlu0 0
        %1153 = vperm.xlu0 %1152, %v908
        %v1154 = vpop.permute.xlu0 %1153
        %1157 = vset.pattern.permute.xlu0 0
        %1158 = vperm.xlu0 %1157, %v909
        %v1159 = vpop.permute.xlu0 %1158
        %1162 = vset.pattern.permute.xlu0 0
        %1163 = vperm.xlu0 %1162, %v910
        %v1164 = vpop.permute.xlu0 %1163
        %1167 = vset.pattern.permute.xlu0 0
        %1168 = vperm.xlu0 %1167, %v911
        %v1169 = vpop.permute.xlu0 %1168
        %1172 = vset.pattern.permute.xlu0 0
        %1173 = vperm.xlu0 %1172, %v912
        %v1174 = vpop.permute.xlu0 %1173
        %1177 = vset.pattern.permute.xlu0 0
        %1178 = vperm.xlu0 %1177, %v913
        %v1179 = vpop.permute.xlu0 %1178
        %1182 = vset.pattern.permute.xlu0 0
        %1183 = vperm.xlu0 %1182, %v914
        %v1184 = vpop.permute.xlu0 %1183
        %1187 = vset.pattern.permute.xlu0 0
        %1188 = vperm.xlu0 %1187, %v915
        %v1189 = vpop.permute.xlu0 %1188
        %1192 = vset.pattern.permute.xlu0 0
        %1193 = vperm.xlu0 %1192, %v916
        %v1194 = vpop.permute.xlu0 %1193
        %v1196 = vmul.f32 %v1119, %v1100
        %v1197 = vmul.f32 %v1124, %v1101
        %v1198 = vmul.f32 %v1129, %v1102
        %v1199 = vmul.f32 %v1134, %v1103
        %v1200 = vmul.f32 %v1139, %v1104
        %v1201 = vmul.f32 %v1144, %v1105
        %v1202 = vmul.f32 %v1149, %v1106
        %v1203 = vmul.f32 %v1154, %v1107
        %v1204 = vmul.f32 %v1159, %v1108
        %v1205 = vmul.f32 %v1164, %v1109
        %v1206 = vmul.f32 %v1169, %v1110
        %v1207 = vmul.f32 %v1174, %v1111
        %v1208 = vmul.f32 %v1179, %v1112
        %v1209 = vmul.f32 %v1184, %v1113
        %v1210 = vmul.f32 %v1189, %v1114
        %v1211 = vmul.f32 %v1194, %v1115
        %1212 = vst [vmem:[%s514] sm:$0xff] %v1196
        %1213 = vst [vmem:[%s514 + $0x8] sm:$0xff] %v1197
        %1214 = vst [vmem:[%s514 + $0x10] sm:$0xff] %v1198
        %1215 = vst [vmem:[%s514 + $0x18] sm:$0xff] %v1199
        %1216 = vst [vmem:[%s514 + $0x20] sm:$0xff] %v1200
        %1217 = vst [vmem:[%s514 + $0x28] sm:$0xff] %v1201
        %1218 = vst [vmem:[%s514 + $0x30] sm:$0xff] %v1202
        %1219 = vst [vmem:[%s514 + $0x38] sm:$0xff] %v1203
        %1220 = vst [vmem:[%s514 + $0x40] sm:$0xff] %v1204
        %1221 = vst [vmem:[%s514 + $0x48] sm:$0xff] %v1205
        %1222 = vst [vmem:[%s514 + $0x50] sm:$0xff] %v1206
        %1223 = vst [vmem:[%s514 + $0x58] sm:$0xff] %v1207
        %1224 = vst [vmem:[%s514 + $0x60] sm:$0xff] %v1208
        %1225 = vst [vmem:[%s514 + $0x68] sm:$0xff] %v1209
        %1226 = vst [vmem:[%s514 + $0x70] sm:$0xff] %v1210
        %1227 = vst [vmem:[%s514 + $0x78] sm:$0xff] %v1211
      $region56: #{norm_dense_gcn_conv.3} parent=47 // pred_fallthru
        _
      %s1228 = smul.u32 16, %s24
      %p1229 = scmp.lt.s32.totalorder %s23, 1
      %s1230 = scalar_select %p1229, %s23, 1
      %p1231 = scmp.lt.s32.totalorder %s1228, 15
      %s1232 = scalar_select %p1231, %s1228, 15
      %s1233 = smul.addr %s1230, 16
      %s1234 = sadd.s32 %s1232, %s1233
      %s1235 = smul.addr %s1234, 8
      %s1236 = scalar_lea.vmem %s7, %s1235
      // Predicated region
      $region57: #{norm_dense_gcn_conv.3} parent=47 // pred_check
        %p1237 = pneg %p248
      $region58: #{norm_dense_gcn_conv.3} parent=47 // pred_check_branch
        %1239 = sbr.rel (%p1237) target = $region60
      $region59: #{norm_dense_gcn_conv.3} parent=47 // pred_region
        %s1240 = smul.u32 16, %s24
      $region60: #{norm_dense_gcn_conv.3} parent=47 // pred_fallthru
        _
    $region48: #{norm_dense_gcn_conv.3} parent=5 // pred_fallthru
      _
    %p1241 = scmp.le.s32.totalorder 2, %s13
    // Predicated region
    $region61: #{norm_dense_gcn_conv.3} parent=5 // pred_check
      %p1242 = pneg %p1241
    $region62: #{norm_dense_gcn_conv.3} parent=5 // pred_check_branch
      %1244 = sbr.rel (%p1242) target = $region64
    $region63: #{norm_dense_gcn_conv.3} parent=5 // pred_region
      %s1245 = ssub.s32 %s13, 2
      // Predicated region
      $region65: #{norm_dense_gcn_conv.3} parent=63 // pred_check
        %p1246 = pneg %p254
      $region66: #{norm_dense_gcn_conv.3} parent=63 // pred_check_branch
        %1248 = sbr.rel (%p1246) target = $region68
      $region67: #{norm_dense_gcn_conv.3} parent=63 // pred_region
        %s1249 = smul.u32 16, %s27
        %p1250 = scmp.lt.s32.totalorder %s26, 1
        %s1251 = scalar_select %p1250, %s26, 1
        %p1252 = scmp.lt.s32.totalorder %s1249, 15
        %s1253 = scalar_select %p1252, %s1249, 15
        %s1254 = smul.addr %s1251, 16
        %s1255 = sadd.s32 %s1253, %s1254
        %s1256 = smul.addr %s1255, 8
        %s1257 = scalar_lea.vmem %s7, %s1256
      $region68: #{norm_dense_gcn_conv.3} parent=63 // pred_fallthru
        _
    $region64: #{norm_dense_gcn_conv.3} parent=5 // pred_fallthru
      _
  $region6: #{norm_dense_gcn_conv.3} parent=0 // loop_footer
    %s17 = sadd.s32 1, %s13
  $region7: #{norm_dense_gcn_conv.3} parent=0 // loop_footer_branch
    %12 = sbr.rel target = $region3
  $region8: #{norm_dense_gcn_conv.3} parent=0 // loop_exit
    _

</llo_original>
